<compile_context>
chip_gen: v7x
topology: tpu7x:2x2x1
jax: 0.10.0
libtpu: 0.0.40
codegen_flags: <defaults>
</compile_context>

<pallas_src>
import functools

import jax
import jax.numpy as jnp
from jax import lax
from jax.experimental import pallas as pl
from jax.experimental.pallas import tpu as pltpu


# --------------------------------- kernels ---------------------------------
def _conv_tile_kernel(x_ref, halo_ref, pe_ref, po_ref, w_ref, b_ref, o_ref,
                      *, nb):
    """One (NB, C, 2*TLh) input tile -> (NB, C, TLh) output tile.

    x_ref:    (NB, C, 2*TLh) input, positions interleaved along lanes.
    halo_ref: (NB, C, 1) last input sample of the previous lane tile
              (zeros for the first tile -> the conv's left zero pad).
    pe_ref:   (2*TLh, TLh) one-hot; column j selects input lane 2j.
    po_ref:   (2*TLh, TLh) one-hot; column j selects input lane 2j+1.
    w_ref:    (3, C, C) conv taps (PyTorch w[:, :, k] -> w_ref[k]).
    b_ref:    (C, 1) f32 bias.
    o_ref:    (NB, C, TLh) output tile.
    """
    pe = pe_ref[...]
    po = po_ref[...]
    w0 = w_ref[0]
    w1 = w_ref[1]
    w2 = w_ref[2]
    bias = b_ref[...]
    wdt = w0.dtype
    tlh = o_ref.shape[-1]
    # Hoisted once per grid step (not per packed batch element).
    lane0 = lax.broadcasted_iota(jnp.int32, (1, tlh), 1) == 0

    for i in range(nb):
        xi = x_ref[i]                                             # (C, 2*TLh)
        # Exact even/odd phase split on the MXU (one-hot columns, f32 acc).
        xe = jnp.dot(xi, pe, preferred_element_type=jnp.float32)  # x[2j]
        xo = jnp.dot(xi, po, preferred_element_type=jnp.float32)  # x[2j+1]
        # Tap k=0 input x[2j-1]: previous odd sample; lane 0 comes from the
        # halo (zero at the global left edge -> the conv's left zero pad).
        prev = pltpu.roll(xo, shift=1, axis=1)
        xprev = jnp.where(lane0, halo_ref[i].astype(jnp.float32), prev)
        # Three accumulating dots: no 3C-wide concat temporary in VMEM.
        acc = jnp.dot(w0, xprev.astype(wdt), preferred_element_type=jnp.float32)
        acc = acc + jnp.dot(w1, xe.astype(wdt), preferred_element_type=jnp.float32)
        acc = acc + jnp.dot(w2, xo.astype(wdt), preferred_element_type=jnp.float32)
        o_ref[i, :, :] = (acc + bias).astype(o_ref.dtype)


def _pool_tile_kernel(x_ref, pavg_ref, o_ref, *, nb):
    """avg_pool1d(k=2, s=2): columns of pavg hold 0.5 at input lanes 2j, 2j+1."""
    pavg = pavg_ref[...]
    for i in range(nb):
        o_ref[i, :, :] = jnp.dot(
            x_ref[i], pavg, preferred_element_type=jnp.float32
        ).astype(o_ref.dtype)


# ------------------------------ tile selection ------------------------------
def _pick_lane_tile(lh, itemsize, cap=None):
    """Output-lane tile.  Whole length when small; otherwise the largest
    multiple of 128 output lanes dividing Lh (>=512 target), capped so the
    per-step footprint (incl. the one-hot phase matrices) stays well inside
    v7x's 64 MiB VMEM: 1024 lanes for 16-bit inputs, 512 for 32-bit."""
    if cap is None:
        cap = 1024 if itemsize <= 2 else 512
    if lh <= cap or lh % 128 != 0:
        return lh
    for k in range(min(lh, cap) // 128, 0, -1):
        t = k * 128
        if lh % t == 0:
            return t
    return lh


def _pick_batch_block(b, c, tl, itemsize, target_bytes=512 * 1024):
    """Pack consecutive batch elements per grid step until the input block is
    ~512 KiB (amortizes ~0.35 us/step overhead, keeps stores lane-dense).
    No '>=2 grid steps' shrink: v5e/v6e are single-TC, and on v7x the
    batch/lane grid already provides parallel steps at production sizes."""
    per = max(1, c * tl * itemsize)
    for d in range(1, b + 1):
        if b % d == 0 and d * per >= target_bytes:
            return d
    return b


# --------------------------------- wrapper ----------------------------------
@functools.partial(
    jax.jit,
    static_argnames=("with_conv", "mxu_dtype", "out_dtype", "lane_tile_cap"))
def downsample_forward(x, params=None, *, with_conv=True,
                       mxu_dtype=jnp.float32, out_dtype=None,
                       lane_tile_cap=None):
    """x: (B, C, L) f32/bf16, PyTorch Conv1d (NCL) layout; L must be even.

    Activations are consumed and produced in their own dtype (pass bf16 end to
    end on v6e/v7x for ~2x less HBM traffic); all accumulation is f32.
    """
    B, C, L = x.shape
    assert L % 2 == 0, "Downsample expects an even length"
    Lh = L // 2
    in_dt = jnp.dtype(x.dtype)
    out_dt = jnp.dtype(x.dtype if out_dtype is None else out_dtype)

    tlh = _pick_lane_tile(Lh, in_dt.itemsize, lane_tile_cap)
    tl = 2 * tlh
    n_t = Lh // tlh
    nb = _pick_batch_block(B, C, tl, in_dt.itemsize)
    n_g = B // nb

    rows = jnp.arange(tl)[:, None]
    cols = jnp.arange(tlh)[None, :]

    grid = (n_g, n_t)
    x_spec = pl.BlockSpec((nb, C, tl), lambda gi, ti: (gi, 0, ti))
    out_spec = pl.BlockSpec((nb, C, tlh), lambda gi, ti: (gi, 0, ti))
    out_shape = jax.ShapeDtypeStruct((B, C, Lh), out_dt)

    if with_conv:
        w = params["conv_w"]                                   # (C, C, 3) OIW
        b = params["conv_b"]                                   # (C,)
        w_taps = jnp.transpose(w, (2, 0, 1)).astype(mxu_dtype)  # (3, C, C), tiny
        b_col = b.reshape(C, 1).astype(jnp.float32)
        # Exact one-hot phase-selection matrices (deinterleave on the MXU).
        pe = (rows == 2 * cols).astype(in_dt)
        po = (rows == 2 * cols + 1).astype(in_dt)

        # Halo: last input sample of the previous lane tile, per (tile, batch);
        # zeros for tile 0.  Size is |x| / TL -> negligible wrapper traffic.
        bcols = x[:, :, tl - 1:L - 1:tl]                         # (B, C, n_t-1)
        halo = jnp.concatenate(
            [jnp.zeros((B, C, 1), in_dt), bcols], axis=-1)       # (B, C, n_t)
        halo = jnp.transpose(halo, (2, 0, 1))[..., None]         # (n_t, B, C, 1)

        flops = 2 * B * Lh * 3 * C * C + 4 * B * n_t * C * tl * tlh
        bytes_accessed = (x.size * in_dt.itemsize
                          + B * C * Lh * out_dt.itemsize
                          + 3 * C * C * jnp.dtype(mxu_dtype).itemsize
                          + 2 * tl * tlh * in_dt.itemsize
                          + n_t * B * C * in_dt.itemsize + 4 * C)
        # Per-step VMEM, assuming everything double-buffered (conservative);
        # explicit limit so production tiles exceed the 16/32 MiB scoped
        # defaults safely while staying inside v7x's 64 MiB physical VMEM.
        block_bytes = (nb * C * tl * in_dt.itemsize
                       + nb * C * tlh * out_dt.itemsize
                       + 2 * tl * tlh * in_dt.itemsize
                       + 3 * C * C * jnp.dtype(mxu_dtype).itemsize
                       + nb * C * in_dt.itemsize + 4 * C)
        vmem_limit = int(min(max(2 * block_bytes + (1 << 20), 16 << 20), 56 << 20))

        out = pl.pallas_call(
            functools.partial(_conv_tile_kernel, nb=nb),
            out_shape=out_shape,
            grid=grid,
            in_specs=[
                x_spec,
                pl.BlockSpec((None, nb, C, 1), lambda gi, ti: (ti, gi, 0, 0)),
                pl.BlockSpec((tl, tlh), lambda gi, ti: (0, 0)),
                pl.BlockSpec((tl, tlh), lambda gi, ti: (0, 0)),
                pl.BlockSpec((3, C, C), lambda gi, ti: (0, 0, 0)),
                pl.BlockSpec((C, 1), lambda gi, ti: (0, 0)),
            ],
            out_specs=out_spec,
            compiler_params=pltpu.CompilerParams(
                dimension_semantics=("parallel", "parallel"),
                vmem_limit_bytes=vmem_limit),
            cost_estimate=pl.CostEstimate(
                flops=int(flops), transcendentals=0,
                bytes_accessed=int(bytes_accessed)),
        )(x, halo, pe, po, w_taps, b_col)
    else:
        # avg pool = one matmul per tile with a constant 0.5 two-hot matrix;
        # reads x natively, writes out natively (no wrapper layout ops).
        pavg = jnp.where(rows // 2 == cols, 0.5, 0.0).astype(in_dt)
        flops = 2 * B * n_t * C * tl * tlh
        bytes_accessed = (x.size * in_dt.itemsize
                          + B * C * Lh * out_dt.itemsize
                          + tl * tlh * in_dt.itemsize)
        block_bytes = (nb * C * tl * in_dt.itemsize
                       + nb * C * tlh * out_dt.itemsize
                       + tl * tlh * in_dt.itemsize)
        vmem_limit = int(min(max(2 * block_bytes + (1 << 20), 16 << 20), 56 << 20))

        out = pl.pallas_call(
            functools.partial(_pool_tile_kernel, nb=nb),
            out_shape=out_shape,
            grid=grid,
            in_specs=[x_spec,
                      pl.BlockSpec((tl, tlh), lambda gi, ti: (0, 0))],
            out_specs=out_spec,
            compiler_params=pltpu.CompilerParams(
                dimension_semantics=("parallel", "parallel"),
                vmem_limit_bytes=vmem_limit),
            cost_estimate=pl.CostEstimate(
                flops=int(flops), transcendentals=0,
                bytes_accessed=int(bytes_accessed)),
        )(x, pavg)
    return out


# ----------------------------- pure-JAX reference ----------------------------
def downsample_ref(x, params, with_conv):
    if with_conv:
        xpad = jnp.pad(x, ((0, 0), (0, 0), (1, 1)))
        out = lax.conv_general_dilated(
            xpad, params["conv_w"], window_strides=(2,), padding=[(0, 0)],
            dimension_numbers=("NCH", "OIH", "NCH"),
            precision=lax.Precision.HIGHEST)
        return out + params["conv_b"][None, :, None]
    B, C, L = x.shape
    return x.reshape(B, C, L // 2, 2).mean(axis=-1)


if __name__ == "__main__":
    key = jax.random.PRNGKey(0)
    kx, kw, kb, kx2 = jax.random.split(key, 4)

    # Small shapes consistent with the module: (B, C, L) = (4, 16, 32).
    B, C, L = 4, 16, 32
    x = jax.random.normal(kx, (B, C, L), jnp.float32)
    params = {
        "conv_w": 0.05 * jax.random.normal(kw, (C, C, 3), jnp.float32),
        "conv_b": 0.05 * jax.random.normal(kb, (C,), jnp.float32),
    }

    # with_conv=True, f32 end-to-end.  Tolerance sized for worst-case MXU
    # operand rounding; a tap-misalignment / halo bug gives O(0.2+) errors.
    out = jax.block_until_ready(downsample_forward(x, params, with_conv=True))
    ref = downsample_ref(x, params, True)
    assert out.shape == (B, C, L // 2), out.shape
    err = float(jnp.max(jnp.abs(out - ref)))
    assert err < 5e-2, f"conv (f32) max abs err {err}"

    # with_conv=True, bf16 activations in/out + bf16 MXU (v6e/v7x fast path).
    x_bf16 = x.astype(jnp.bfloat16)
    out_bf = jax.block_until_ready(
        downsample_forward(x_bf16, params, with_conv=True,
                           mxu_dtype=jnp.bfloat16))
    assert out_bf.dtype == jnp.bfloat16
    ref_bf = downsample_ref(x_bf16.astype(jnp.float32), params, True)
    err_bf = float(jnp.max(jnp.abs(out_bf.astype(jnp.float32) - ref_bf)))
    assert err_bf < 5e-2, f"conv (bf16) max abs err {err_bf}"

    # with_conv=True, lane-tiled path (small cap forces n_t>1 and exercises
    # the boundary-halo input).
    B2, L2 = 2, 512
    x2 = jax.random.normal(kx2, (B2, C, L2), jnp.float32)
    out2 = jax.block_until_ready(
        downsample_forward(x2, params, with_conv=True, lane_tile_cap=128))
    ref2 = downsample_ref(x2, params, True)
    assert out2.shape == (B2, C, L2 // 2)
    err2 = float(jnp.max(jnp.abs(out2 - ref2)))
    assert err2 < 5e-2, f"conv (lane-tiled) max abs err {err2}"

    # with_conv=False: avg_pool1d(kernel_size=2, stride=2).
    out_pool = jax.block_until_ready(downsample_forward(x, None, with_conv=False))
    ref_pool = downsample_ref(x, None, False)
    err_pool = float(jnp.max(jnp.abs(out_pool - ref_pool)))
    assert err_pool < 2e-2, f"avg_pool max abs err {err_pool}"

    print("KERNEL_OK")
</pallas_src>

<mosaic_0001>
module attributes {stable_mosaic.version = 11 : i64} {
  func.func @_conv_tile_kernel(%arg0: i32, %arg1: i32, %arg2: memref<4x16x32xf32, #tpu.memory_space<vmem>>, %arg3: memref<1x4x16x1xf32, #tpu.memory_space<vmem>>, %arg4: memref<32x16xf32, #tpu.memory_space<vmem>>, %arg5: memref<32x16xf32, #tpu.memory_space<vmem>>, %arg6: memref<3x16x16xf32, #tpu.memory_space<vmem>>, %arg7: memref<16x1xf32, #tpu.memory_space<vmem>>, %arg8: memref<4x16x16xf32, #tpu.memory_space<vmem>>) attributes {dimension_semantics = [#tpu.dimension_semantics<parallel>, #tpu.dimension_semantics<parallel>], iteration_bounds = array<i64: 1, 1>, scalar_prefetch = 0 : i64, scratch_operands = 0 : i64, tpu.core_type = #tpu.core_type<tc>, window_params = [{transform_indices = @transform_0, window_bounds = array<i64: 4, 16, 32>}, {transform_indices = @transform_1, window_bounds = array<i64: 1, 4, 16, 1>}, {pipeline_mode = #tpu.pipeline_mode<synchronous>, transform_indices = @transform_2, window_bounds = array<i64: 32, 16>}, {pipeline_mode = #tpu.pipeline_mode<synchronous>, transform_indices = @transform_3, window_bounds = array<i64: 32, 16>}, {pipeline_mode = #tpu.pipeline_mode<synchronous>, transform_indices = @transform_4, window_bounds = array<i64: 3, 16, 16>}, {pipeline_mode = #tpu.pipeline_mode<synchronous>, transform_indices = @transform_5, window_bounds = array<i64: 16, 1>}, {transform_indices = @transform_6, window_bounds = array<i64: 4, 16, 16>}]} {
    %c0 = arith.constant 0 : index
    %c0_0 = arith.constant 0 : index
    %0 = vector.load %arg4[%c0, %c0_0] : memref<32x16xf32, #tpu.memory_space<vmem>>, vector<32x16xf32>
    %c0_1 = arith.constant 0 : index
    %c0_2 = arith.constant 0 : index
    %1 = vector.load %arg5[%c0_1, %c0_2] : memref<32x16xf32, #tpu.memory_space<vmem>>, vector<32x16xf32>
    %c0_3 = arith.constant 0 : index
    %c0_4 = arith.constant 0 : index
    %c0_5 = arith.constant 0 : index
    %2 = vector.load %arg6[%c0_3, %c0_4, %c0_5] : memref<3x16x16xf32, #tpu.memory_space<vmem>>, vector<1x16x16xf32>
    %3 = vector.shape_cast %2 : vector<1x16x16xf32> to vector<16x16xf32>
    %c1 = arith.constant 1 : index
    %c0_6 = arith.constant 0 : index
    %c0_7 = arith.constant 0 : index
    %4 = vector.load %arg6[%c1, %c0_6, %c0_7] : memref<3x16x16xf32, #tpu.memory_space<vmem>>, vector<1x16x16xf32>
    %5 = vector.shape_cast %4 : vector<1x16x16xf32> to vector<16x16xf32>
    %c2 = arith.constant 2 : index
    %c0_8 = arith.constant 0 : index
    %c0_9 = arith.constant 0 : index
    %6 = vector.load %arg6[%c2, %c0_8, %c0_9] : memref<3x16x16xf32, #tpu.memory_space<vmem>>, vector<1x16x16xf32>
    %7 = vector.shape_cast %6 : vector<1x16x16xf32> to vector<16x16xf32>
    %c0_10 = arith.constant 0 : index
    %c0_11 = arith.constant 0 : index
    %8 = vector.load %arg7[%c0_10, %c0_11] : memref<16x1xf32, #tpu.memory_space<vmem>>, vector<16x1xf32>
    %9 = tpu.iota {dimensions = array<i32: 1>} : vector<1x16xi32>
    %c0_i32 = arith.constant 0 : i32
    %10 = vector.broadcast %c0_i32 : i32 to vector<1x16xi32>
    %11 = arith.cmpi eq, %9, %10 : vector<1x16xi32>
    %c0_12 = arith.constant 0 : index
    %c0_13 = arith.constant 0 : index
    %c0_14 = arith.constant 0 : index
    %12 = vector.load %arg2[%c0_12, %c0_13, %c0_14] : memref<4x16x32xf32, #tpu.memory_space<vmem>>, vector<1x16x32xf32>
    %13 = vector.shape_cast %12 : vector<1x16x32xf32> to vector<16x32xf32>
    %cst = arith.constant dense<0.000000e+00> : vector<16x16xf32>
    %14 = tpu.matmul %13, %0, %cst {dimension_numbers = #tpu.dot_dimension_numbers<[1], [0], [0], [1], [0, 0, 1, 1], [], []>} : vector<16x32xf32>, vector<32x16xf32>, vector<16x16xf32> -> vector<16x16xf32>
    %cst_15 = arith.constant dense<0.000000e+00> : vector<16x16xf32>
    %15 = tpu.matmul %13, %1, %cst_15 {dimension_numbers = #tpu.dot_dimension_numbers<[1], [0], [0], [1], [0, 0, 1, 1], [], []>} : vector<16x32xf32>, vector<32x16xf32>, vector<16x16xf32> -> vector<16x16xf32>
    %c1_i32 = arith.constant 1 : i32
    %16 = tpu.dynamic_rotate %15 by %c1_i32 dim 1 : vector<16x16xf32>, i32 -> vector<16x16xf32>
    %c0_16 = arith.constant 0 : index
    %c0_17 = arith.constant 0 : index
    %c0_18 = arith.constant 0 : index
    %c0_19 = arith.constant 0 : index
    %17 = vector.load %arg3[%c0_16, %c0_17, %c0_18, %c0_19] : memref<1x4x16x1xf32, #tpu.memory_space<vmem>>, vector<1x1x16x1xf32>
    %18 = vector.shape_cast %17 : vector<1x1x16x1xf32> to vector<16x1xf32>
    %19 = vector.shape_cast %11 : vector<1x16xi1> to vector<1x16xi1>
    %20 = vector.broadcast %19 : vector<1x16xi1> to vector<16x16xi1>
    %21 = vector.shape_cast %18 : vector<16x1xf32> to vector<16x1xf32>
    %22 = vector.broadcast %21 : vector<16x1xf32> to vector<16x16xf32>
    %23 = arith.select %20, %22, %16 : vector<16x16xi1>, vector<16x16xf32>
    %cst_20 = arith.constant dense<0.000000e+00> : vector<16x16xf32>
    %24 = tpu.matmul %3, %23, %cst_20 {dimension_numbers = #tpu.dot_dimension_numbers<[1], [0], [0], [1], [0, 0, 1, 1], [], []>} : vector<16x16xf32>, vector<16x16xf32>, vector<16x16xf32> -> vector<16x16xf32>
    %cst_21 = arith.constant dense<0.000000e+00> : vector<16x16xf32>
    %25 = tpu.matmul %5, %14, %cst_21 {dimension_numbers = #tpu.dot_dimension_numbers<[1], [0], [0], [1], [0, 0, 1, 1], [], []>} : vector<16x16xf32>, vector<16x16xf32>, vector<16x16xf32> -> vector<16x16xf32>
    %26 = arith.addf %24, %25 : vector<16x16xf32>
    %cst_22 = arith.constant dense<0.000000e+00> : vector<16x16xf32>
    %27 = tpu.matmul %7, %15, %cst_22 {dimension_numbers = #tpu.dot_dimension_numbers<[1], [0], [0], [1], [0, 0, 1, 1], [], []>} : vector<16x16xf32>, vector<16x16xf32>, vector<16x16xf32> -> vector<16x16xf32>
    %28 = arith.addf %26, %27 : vector<16x16xf32>
    %29 = vector.broadcast %8 : vector<16x1xf32> to vector<16x16xf32>
    %30 = arith.addf %28, %29 : vector<16x16xf32>
    %c0_23 = arith.constant 0 : index
    %c0_24 = arith.constant 0 : index
    %c0_25 = arith.constant 0 : index
    %31 = vector.load %arg8[%c0_23, %c0_24, %c0_25] : memref<4x16x16xf32, #tpu.memory_space<vmem>>, vector<1x16x16xf32>
    %32 = vector.shape_cast %31 : vector<1x16x16xf32> to vector<16x16xf32>
    %33 = vector.shape_cast %30 : vector<16x16xf32> to vector<1x16x16xf32>
    tpu.vector_store %arg8[%c0_23, %c0_24, %c0_25], %33 {strides = array<i32>} : memref<4x16x16xf32, #tpu.memory_space<vmem>>, vector<1x16x16xf32>,
    %c1_26 = arith.constant 1 : index
    %c0_27 = arith.constant 0 : index
    %c0_28 = arith.constant 0 : index
    %34 = vector.load %arg2[%c1_26, %c0_27, %c0_28] : memref<4x16x32xf32, #tpu.memory_space<vmem>>, vector<1x16x32xf32>
    %35 = vector.shape_cast %34 : vector<1x16x32xf32> to vector<16x32xf32>
    %cst_29 = arith.constant dense<0.000000e+00> : vector<16x16xf32>
    %36 = tpu.matmul %35, %0, %cst_29 {dimension_numbers = #tpu.dot_dimension_numbers<[1], [0], [0], [1], [0, 0, 1, 1], [], []>} : vector<16x32xf32>, vector<32x16xf32>, vector<16x16xf32> -> vector<16x16xf32>
    %cst_30 = arith.constant dense<0.000000e+00> : vector<16x16xf32>
    %37 = tpu.matmul %35, %1, %cst_30 {dimension_numbers = #tpu.dot_dimension_numbers<[1], [0], [0], [1], [0, 0, 1, 1], [], []>} : vector<16x32xf32>, vector<32x16xf32>, vector<16x16xf32> -> vector<16x16xf32>
    %c1_i32_31 = arith.constant 1 : i32
    %38 = tpu.dynamic_rotate %37 by %c1_i32_31 dim 1 : vector<16x16xf32>, i32 -> vector<16x16xf32>
    %c0_32 = arith.constant 0 : index
    %c1_33 = arith.constant 1 : index
    %c0_34 = arith.constant 0 : index
    %c0_35 = arith.constant 0 : index
    %39 = vector.load %arg3[%c0_32, %c1_33, %c0_34, %c0_35] : memref<1x4x16x1xf32, #tpu.memory_space<vmem>>, vector<1x1x16x1xf32>
    %40 = vector.shape_cast %39 : vector<1x1x16x1xf32> to vector<16x1xf32>
    %41 = vector.shape_cast %11 : vector<1x16xi1> to vector<1x16xi1>
    %42 = vector.broadcast %41 : vector<1x16xi1> to vector<16x16xi1>
    %43 = vector.shape_cast %40 : vector<16x1xf32> to vector<16x1xf32>
    %44 = vector.broadcast %43 : vector<16x1xf32> to vector<16x16xf32>
    %45 = arith.select %42, %44, %38 : vector<16x16xi1>, vector<16x16xf32>
    %cst_36 = arith.constant dense<0.000000e+00> : vector<16x16xf32>
    %46 = tpu.matmul %3, %45, %cst_36 {dimension_numbers = #tpu.dot_dimension_numbers<[1], [0], [0], [1], [0, 0, 1, 1], [], []>} : vector<16x16xf32>, vector<16x16xf32>, vector<16x16xf32> -> vector<16x16xf32>
    %cst_37 = arith.constant dense<0.000000e+00> : vector<16x16xf32>
    %47 = tpu.matmul %5, %36, %cst_37 {dimension_numbers = #tpu.dot_dimension_numbers<[1], [0], [0], [1], [0, 0, 1, 1], [], []>} : vector<16x16xf32>, vector<16x16xf32>, vector<16x16xf32> -> vector<16x16xf32>
    %48 = arith.addf %46, %47 : vector<16x16xf32>
    %cst_38 = arith.constant dense<0.000000e+00> : vector<16x16xf32>
    %49 = tpu.matmul %7, %37, %cst_38 {dimension_numbers = #tpu.dot_dimension_numbers<[1], [0], [0], [1], [0, 0, 1, 1], [], []>} : vector<16x16xf32>, vector<16x16xf32>, vector<16x16xf32> -> vector<16x16xf32>
    %50 = arith.addf %48, %49 : vector<16x16xf32>
    %51 = vector.broadcast %8 : vector<16x1xf32> to vector<16x16xf32>
    %52 = arith.addf %50, %51 : vector<16x16xf32>
    %c1_39 = arith.constant 1 : index
    %c0_40 = arith.constant 0 : index
    %c0_41 = arith.constant 0 : index
    %53 = vector.load %arg8[%c1_39, %c0_40, %c0_41] : memref<4x16x16xf32, #tpu.memory_space<vmem>>, vector<1x16x16xf32>
    %54 = vector.shape_cast %53 : vector<1x16x16xf32> to vector<16x16xf32>
    %55 = vector.shape_cast %52 : vector<16x16xf32> to vector<1x16x16xf32>
    tpu.vector_store %arg8[%c1_39, %c0_40, %c0_41], %55 {strides = array<i32>} : memref<4x16x16xf32, #tpu.memory_space<vmem>>, vector<1x16x16xf32>,
    %c2_42 = arith.constant 2 : index
    %c0_43 = arith.constant 0 : index
    %c0_44 = arith.constant 0 : index
    %56 = vector.load %arg2[%c2_42, %c0_43, %c0_44] : memref<4x16x32xf32, #tpu.memory_space<vmem>>, vector<1x16x32xf32>
    %57 = vector.shape_cast %56 : vector<1x16x32xf32> to vector<16x32xf32>
    %cst_45 = arith.constant dense<0.000000e+00> : vector<16x16xf32>
    %58 = tpu.matmul %57, %0, %cst_45 {dimension_numbers = #tpu.dot_dimension_numbers<[1], [0], [0], [1], [0, 0, 1, 1], [], []>} : vector<16x32xf32>, vector<32x16xf32>, vector<16x16xf32> -> vector<16x16xf32>
    %cst_46 = arith.constant dense<0.000000e+00> : vector<16x16xf32>
    %59 = tpu.matmul %57, %1, %cst_46 {dimension_numbers = #tpu.dot_dimension_numbers<[1], [0], [0], [1], [0, 0, 1, 1], [], []>} : vector<16x32xf32>, vector<32x16xf32>, vector<16x16xf32> -> vector<16x16xf32>
    %c1_i32_47 = arith.constant 1 : i32
    %60 = tpu.dynamic_rotate %59 by %c1_i32_47 dim 1 : vector<16x16xf32>, i32 -> vector<16x16xf32>
    %c0_48 = arith.constant 0 : index
    %c2_49 = arith.constant 2 : index
    %c0_50 = arith.constant 0 : index
    %c0_51 = arith.constant 0 : index
    %61 = vector.load %arg3[%c0_48, %c2_49, %c0_50, %c0_51] : memref<1x4x16x1xf32, #tpu.memory_space<vmem>>, vector<1x1x16x1xf32>
    %62 = vector.shape_cast %61 : vector<1x1x16x1xf32> to vector<16x1xf32>
    %63 = vector.shape_cast %11 : vector<1x16xi1> to vector<1x16xi1>
    %64 = vector.broadcast %63 : vector<1x16xi1> to vector<16x16xi1>
    %65 = vector.shape_cast %62 : vector<16x1xf32> to vector<16x1xf32>
    %66 = vector.broadcast %65 : vector<16x1xf32> to vector<16x16xf32>
    %67 = arith.select %64, %66, %60 : vector<16x16xi1>, vector<16x16xf32>
    %cst_52 = arith.constant dense<0.000000e+00> : vector<16x16xf32>
    %68 = tpu.matmul %3, %67, %cst_52 {dimension_numbers = #tpu.dot_dimension_numbers<[1], [0], [0], [1], [0, 0, 1, 1], [], []>} : vector<16x16xf32>, vector<16x16xf32>, vector<16x16xf32> -> vector<16x16xf32>
    %cst_53 = arith.constant dense<0.000000e+00> : vector<16x16xf32>
    %69 = tpu.matmul %5, %58, %cst_53 {dimension_numbers = #tpu.dot_dimension_numbers<[1], [0], [0], [1], [0, 0, 1, 1], [], []>} : vector<16x16xf32>, vector<16x16xf32>, vector<16x16xf32> -> vector<16x16xf32>
    %70 = arith.addf %68, %69 : vector<16x16xf32>
    %cst_54 = arith.constant dense<0.000000e+00> : vector<16x16xf32>
    %71 = tpu.matmul %7, %59, %cst_54 {dimension_numbers = #tpu.dot_dimension_numbers<[1], [0], [0], [1], [0, 0, 1, 1], [], []>} : vector<16x16xf32>, vector<16x16xf32>, vector<16x16xf32> -> vector<16x16xf32>
    %72 = arith.addf %70, %71 : vector<16x16xf32>
    %73 = vector.broadcast %8 : vector<16x1xf32> to vector<16x16xf32>
    %74 = arith.addf %72, %73 : vector<16x16xf32>
    %c2_55 = arith.constant 2 : index
    %c0_56 = arith.constant 0 : index
    %c0_57 = arith.constant 0 : index
    %75 = vector.load %arg8[%c2_55, %c0_56, %c0_57] : memref<4x16x16xf32, #tpu.memory_space<vmem>>, vector<1x16x16xf32>
    %76 = vector.shape_cast %75 : vector<1x16x16xf32> to vector<16x16xf32>
    %77 = vector.shape_cast %74 : vector<16x16xf32> to vector<1x16x16xf32>
    tpu.vector_store %arg8[%c2_55, %c0_56, %c0_57], %77 {strides = array<i32>} : memref<4x16x16xf32, #tpu.memory_space<vmem>>, vector<1x16x16xf32>,
    %c3 = arith.constant 3 : index
    %c0_58 = arith.constant 0 : index
    %c0_59 = arith.constant 0 : index
    %78 = vector.load %arg2[%c3, %c0_58, %c0_59] : memref<4x16x32xf32, #tpu.memory_space<vmem>>, vector<1x16x32xf32>
    %79 = vector.shape_cast %78 : vector<1x16x32xf32> to vector<16x32xf32>
    %cst_60 = arith.constant dense<0.000000e+00> : vector<16x16xf32>
    %80 = tpu.matmul %79, %0, %cst_60 {dimension_numbers = #tpu.dot_dimension_numbers<[1], [0], [0], [1], [0, 0, 1, 1], [], []>} : vector<16x32xf32>, vector<32x16xf32>, vector<16x16xf32> -> vector<16x16xf32>
    %cst_61 = arith.constant dense<0.000000e+00> : vector<16x16xf32>
    %81 = tpu.matmul %79, %1, %cst_61 {dimension_numbers = #tpu.dot_dimension_numbers<[1], [0], [0], [1], [0, 0, 1, 1], [], []>} : vector<16x32xf32>, vector<32x16xf32>, vector<16x16xf32> -> vector<16x16xf32>
    %c1_i32_62 = arith.constant 1 : i32
    %82 = tpu.dynamic_rotate %81 by %c1_i32_62 dim 1 : vector<16x16xf32>, i32 -> vector<16x16xf32>
    %c0_63 = arith.constant 0 : index
    %c3_64 = arith.constant 3 : index
    %c0_65 = arith.constant 0 : index
    %c0_66 = arith.constant 0 : index
    %83 = vector.load %arg3[%c0_63, %c3_64, %c0_65, %c0_66] : memref<1x4x16x1xf32, #tpu.memory_space<vmem>>, vector<1x1x16x1xf32>
    %84 = vector.shape_cast %83 : vector<1x1x16x1xf32> to vector<16x1xf32>
    %85 = vector.shape_cast %11 : vector<1x16xi1> to vector<1x16xi1>
    %86 = vector.broadcast %85 : vector<1x16xi1> to vector<16x16xi1>
    %87 = vector.shape_cast %84 : vector<16x1xf32> to vector<16x1xf32>
    %88 = vector.broadcast %87 : vector<16x1xf32> to vector<16x16xf32>
    %89 = arith.select %86, %88, %82 : vector<16x16xi1>, vector<16x16xf32>
    %cst_67 = arith.constant dense<0.000000e+00> : vector<16x16xf32>
    %90 = tpu.matmul %3, %89, %cst_67 {dimension_numbers = #tpu.dot_dimension_numbers<[1], [0], [0], [1], [0, 0, 1, 1], [], []>} : vector<16x16xf32>, vector<16x16xf32>, vector<16x16xf32> -> vector<16x16xf32>
    %cst_68 = arith.constant dense<0.000000e+00> : vector<16x16xf32>
    %91 = tpu.matmul %5, %80, %cst_68 {dimension_numbers = #tpu.dot_dimension_numbers<[1], [0], [0], [1], [0, 0, 1, 1], [], []>} : vector<16x16xf32>, vector<16x16xf32>, vector<16x16xf32> -> vector<16x16xf32>
    %92 = arith.addf %90, %91 : vector<16x16xf32>
    %cst_69 = arith.constant dense<0.000000e+00> : vector<16x16xf32>
    %93 = tpu.matmul %7, %81, %cst_69 {dimension_numbers = #tpu.dot_dimension_numbers<[1], [0], [0], [1], [0, 0, 1, 1], [], []>} : vector<16x16xf32>, vector<16x16xf32>, vector<16x16xf32> -> vector<16x16xf32>
    %94 = arith.addf %92, %93 : vector<16x16xf32>
    %95 = vector.broadcast %8 : vector<16x1xf32> to vector<16x16xf32>
    %96 = arith.addf %94, %95 : vector<16x16xf32>
    %c3_70 = arith.constant 3 : index
    %c0_71 = arith.constant 0 : index
    %c0_72 = arith.constant 0 : index
    %97 = vector.load %arg8[%c3_70, %c0_71, %c0_72] : memref<4x16x16xf32, #tpu.memory_space<vmem>>, vector<1x16x16xf32>
    %98 = vector.shape_cast %97 : vector<1x16x16xf32> to vector<16x16xf32>
    %99 = vector.shape_cast %96 : vector<16x16xf32> to vector<1x16x16xf32>
    tpu.vector_store %arg8[%c3_70, %c0_71, %c0_72], %99 {strides = array<i32>} : memref<4x16x16xf32, #tpu.memory_space<vmem>>, vector<1x16x16xf32>,
    return
  }
  func.func @transform_0(%arg0: i32, %arg1: i32) -> (i32, i32, i32) {
    %c0_i32 = arith.constant 0 : i32
    %c0_i32_0 = arith.constant 0 : i32
    return %arg0, %c0_i32, %arg1 : i32, i32, i32
  }
  func.func @transform_1(%arg0: i32, %arg1: i32) -> (i32, i32, i32, i32) {
    %c0_i32 = arith.constant 0 : i32
    %c0_i32_0 = arith.constant 0 : i32
    %c0_i32_1 = arith.constant 0 : i32
    return %arg1, %arg0, %c0_i32, %c0_i32_0 : i32, i32, i32, i32
  }
  func.func @transform_2(%arg0: i32, %arg1: i32) -> (i32, i32) {
    %c0_i32 = arith.constant 0 : i32
    %c0_i32_0 = arith.constant 0 : i32
    %c0_i32_1 = arith.constant 0 : i32
    return %c0_i32, %c0_i32_0 : i32, i32
  }
  func.func @transform_3(%arg0: i32, %arg1: i32) -> (i32, i32) {
    %c0_i32 = arith.constant 0 : i32
    %c0_i32_0 = arith.constant 0 : i32
    %c0_i32_1 = arith.constant 0 : i32
    return %c0_i32, %c0_i32_0 : i32, i32
  }
  func.func @transform_4(%arg0: i32, %arg1: i32) -> (i32, i32, i32) {
    %c0_i32 = arith.constant 0 : i32
    %c0_i32_0 = arith.constant 0 : i32
    %c0_i32_1 = arith.constant 0 : i32
    %c0_i32_2 = arith.constant 0 : i32
    return %c0_i32, %c0_i32_0, %c0_i32_1 : i32, i32, i32
  }
  func.func @transform_5(%arg0: i32, %arg1: i32) -> (i32, i32) {
    %c0_i32 = arith.constant 0 : i32
    %c0_i32_0 = arith.constant 0 : i32
    %c0_i32_1 = arith.constant 0 : i32
    return %c0_i32, %c0_i32_0 : i32, i32
  }
  func.func @transform_6(%arg0: i32, %arg1: i32) -> (i32, i32, i32) {
    %c0_i32 = arith.constant 0 : i32
    %c0_i32_0 = arith.constant 0 : i32
    return %arg0, %c0_i32, %arg1 : i32, i32, i32
  }
}

</mosaic_0001>

<llo_original>
// kernel: downsample_forward.1
$region0: #{downsample_forward.1}
  #allocation0 [shape = 'u32[]', space=smem, size = 0x4, offset = 0x4, fixed_abs, tag = 'smem constant byte address 0x4 - core index']
  #allocation1 [shape = 'u32[144,128]{1,0:T(1,128)}', space=vmem, size = 0x12000, scoped, tag = 'internal scratch']
  %s0 = inlined_call_operand.vmem [shape: f32[4,16,32], index: 0, kind: input, shape index: {}]
  %s1 = inlined_call_operand.vmem [shape: f32[1,4,16,1], index: 1, kind: input, shape index: {}]
  %s2 = inlined_call_operand.vmem [shape: f32[32,16], index: 2, kind: input, shape index: {}]
  %s3 = inlined_call_operand.vmem [shape: f32[32,16], index: 3, kind: input, shape index: {}]
  %s4 = inlined_call_operand.vmem [shape: f32[3,16,16], index: 4, kind: input, shape index: {}]
  %s5 = inlined_call_operand.vmem [shape: f32[16,1], index: 5, kind: input, shape index: {}]
  %s6 = inlined_call_operand.hbm [shape: f32[4,16,16], index: 6, kind: output, shape index: {}]
  %s7 = sld [smem:[#allocation0]]
  $region34: #{downsample_forward.1} parent=0
    _
  %s9 = ssub.s32 1, %s7
  %s10 = scalar_select 0, %s9, %s7
  $region1: #{downsample_forward.1} parent=0
    #allocation2 [shape = 'u8[32768]{0}', space=vmem, size = 0x8000, scoped, tag = 'output window, operand 0, single buffered']
    #allocation3 [shape = 's32[1]{0}', space=sflag, size = 0x4, scoped, tag = 'scoped memory for downsample_forward.1']
    %11 = vsyncpa [#allocation3], 0
    // Predicated region
    $region2: #{downsample_forward.1} parent=1 // pred_check
      _
    $region3: #{downsample_forward.1} parent=1 // pred_check_branch
      %13 = sbr.rel (0) target = $region5
    $region4: #{downsample_forward.1} parent=1 // pred_region
      _
    $region5: #{downsample_forward.1} parent=1 // pred_fallthru
      _
    // Predicated region
    $region6: #{downsample_forward.1} parent=1 // pred_check
      _
    $region7: #{downsample_forward.1} parent=1 // pred_check_branch
      %15 = sbr.rel (0) target = $region9
    $region8: #{downsample_forward.1} parent=1 // pred_region
      _
    $region9: #{downsample_forward.1} parent=1 // pred_fallthru
      _
    // Predicated region
    $region10: #{downsample_forward.1} parent=1 // pred_check
      _
    $region11: #{downsample_forward.1} parent=1 // pred_check_branch
      %17 = sbr.rel (0) target = $region13
    $region12: #{downsample_forward.1} parent=1 // pred_region
      _
    $region13: #{downsample_forward.1} parent=1 // pred_fallthru
      _
    // Predicated region
    $region14: #{downsample_forward.1} parent=1 // pred_check
      _
    $region15: #{downsample_forward.1} parent=1 // pred_check_branch
      %19 = sbr.rel (0) target = $region17
    $region16: #{downsample_forward.1} parent=1 // pred_region
      _
    $region17: #{downsample_forward.1} parent=1 // pred_fallthru
      _
    // Predicated region
    $region18: #{downsample_forward.1} parent=1 // pred_check
      _
    $region19: #{downsample_forward.1} parent=1 // pred_check_branch
      %21 = sbr.rel (0) target = $region21
    $region20: #{downsample_forward.1} parent=1 // pred_region
      _
    $region21: #{downsample_forward.1} parent=1 // pred_fallthru
      _
    // Predicated region
    $region22: #{downsample_forward.1} parent=1 // pred_check
      _
    $region23: #{downsample_forward.1} parent=1 // pred_check_branch
      %23 = sbr.rel (0) target = $region25
    $region24: #{downsample_forward.1} parent=1 // pred_region
      _
    $region25: #{downsample_forward.1} parent=1 // pred_fallthru
      _
    %v24 = vld [vmem:[%s2] sm:$0xff]
    %v25 = vld [vmem:[%s2 + $0x8] sm:$0xff]
    %v26 = vld [vmem:[%s2 + $0x10] sm:$0xff]
    %v27 = vld [vmem:[%s2 + $0x18] sm:$0xff]
    %v28 = vld [vmem:[%s3] sm:$0xff]
    %v29 = vld [vmem:[%s3 + $0x8] sm:$0xff]
    %v30 = vld [vmem:[%s3 + $0x10] sm:$0xff]
    %v31 = vld [vmem:[%s3 + $0x18] sm:$0xff]
    %v32 = vld [vmem:[%s4] sm:$0xff]
    %v33 = vld [vmem:[%s4 + $0x8] sm:$0xff]
    %s34 = scalar_lea.vmem %s4, 16
    %v35 = vld [vmem:[%s34] sm:$0xff]
    %v36 = vld [vmem:[%s34 + $0x8] sm:$0xff]
    %s37 = scalar_lea.vmem %s4, 32
    %v38 = vld [vmem:[%s37] sm:$0xff]
    %v39 = vld [vmem:[%s37 + $0x8] sm:$0xff]
    %v40 = vld [vmem:[%s5] sm:$0xff]
    %v41 = vld [vmem:[%s5 + $0x8] sm:$0xff]
    %v42 = vlaneseq
    %v43 = vand.u32 %v42, 127
    %vm44 = vcmp.eq.s32.totalorder %v43, 0
    %v45 = vld [vmem:[%s0] sm:$0xff]
    %v46 = vld [vmem:[%s0 + $0x8] sm:$0xff]
    %vm47 = vcmask 261120
    %v49 = vsel %vm47, %v45, 0
    %v52 = vsel %vm47, %v46, 0
    %54 = vmatprep.subr.mxu0 0.0
    %55 = vmatpush1.msra.mxu0 %v24
    %56 = vmatprep.subr.mxu0 0.0
    %57 = vmatpush1.msra.mxu0 %v25
    %58 = vmatprep.subr.mxu0 0.0
    %59 = vmatpush1.msra.mxu0 %v26
    %60 = vmatprep.subr.mxu0 0.0
    %61 = vmatpush1.msra.mxu0 %v27
    %62 = vmatprep.subr.mxu0 0.0
    %63 = vmatpush1.msra.mxu0 0.0
    %64 = vmatprep.subr.mxu0 0.0
    %65 = vmatpush1.msra.mxu0 0.0
    %66 = vmatprep.subr.mxu0 0.0
    %67 = vmatpush1.msra.mxu0 0.0
    %68 = vmatprep.subr.mxu0 0.0
    %69 = vmatpush1.msra.mxu0 0.0
    %70 = vmatprep.subr.mxu0 0.0
    %71 = vmatpush1.msra.mxu0 0.0
    %72 = vmatprep.subr.mxu0 0.0
    %73 = vmatpush1.msra.mxu0 0.0
    %74 = vmatprep.subr.mxu0 0.0
    %75 = vmatpush1.msra.mxu0 0.0
    %76 = vmatprep.subr.mxu0 0.0
    %77 = vmatpush1.msra.mxu0 0.0
    %78 = vmatprep.subr.mxu0 0.0
    %79 = vmatpush1.msra.mxu0 0.0
    %80 = vmatprep.subr.mxu0 0.0
    %81 = vmatpush1.msra.mxu0 0.0
    %82 = vmatprep.subr.mxu0 0.0
    %83 = vmatpush1.msra.mxu0 0.0
    %84 = vmatprep.subr.mxu0 0.0
    %85 = vmatpush1.msra.mxu0 0.0
    %86 = vmatprep.subr.mxu0 0.0
    %87 = vmatpush1.msra.mxu0 0.0
    %88 = vmatprep.subr.mxu0 0.0
    %89 = vmatpush1.msra.mxu0 0.0
    %90 = vmatprep.subr.mxu0 0.0
    %91 = vmatpush1.msra.mxu0 0.0
    %92 = vmatprep.subr.mxu0 0.0
    %93 = vmatpush1.msra.mxu0 0.0
    %94 = vmatprep.subr.mxu0 0.0
    %95 = vmatpush1.msra.mxu0 0.0
    %96 = vmatprep.subr.mxu0 0.0
    %97 = vmatpush1.msra.mxu0 0.0
    %98 = vmatprep.subr.mxu0 0.0
    %99 = vmatpush1.msra.mxu0 0.0
    %100 = vmatprep.subr.mxu0 0.0
    %101 = vmatpush1.msra.mxu0 0.0
    %102 = vmatprep.subr.mxu0 0.0
    %103 = vmatpush1.msra.mxu0 0.0
    %104 = vmatprep.subr.mxu0 0.0
    %105 = vmatpush1.msra.mxu0 0.0
    %106 = vmatprep.subr.mxu0 0.0
    %107 = vmatpush1.msra.mxu0 0.0
    %108 = vmatprep.subr.mxu0 0.0
    %109 = vmatpush1.msra.mxu0 0.0
    %110 = vmatprep.subr.mxu0 0.0
    %111 = vmatpush1.msra.mxu0 0.0
    %112 = vmatprep.subr.mxu0 0.0
    %113 = vmatpush1.msra.mxu0 0.0
    %114 = vmatprep.subr.mxu0 0.0
    %115 = vmatpush1.msra.mxu0 0.0
    %116 = vmatprep.subr.mxu0 0.0
    %117 = vmatpush1.msra.mxu0 0.0
    %118 = vmatprep.mubr.f32.mxu0 0.0
    %119 = vmatmul.mubr.f32.gmra.mrb[0].mxu0 %v49
    %v120 = vpop.f32.mrb[0].mxu0
    %v121 = vadd.f32 0.0, %v120
    %v122 = vpop.f32.mrb[0].mxu0
    %123 = vmatprep.mubr.f32.mxu0 0.0
    %124 = vmatmul.mubr.f32.gmra.mrb[0].mxu0 %v52
    %v125 = vpop.f32.mrb[0].mxu0
    %v126 = vadd.f32 0.0, %v125
    %v127 = vpop.f32.mrb[0].mxu0
    %128 = vdwg.mxu0
    %129 = vmatprep.subr.mxu0 0.0
    %130 = vmatpush1.msra.mxu0 %v28
    %131 = vmatprep.subr.mxu0 0.0
    %132 = vmatpush1.msra.mxu0 %v29
    %133 = vmatprep.subr.mxu0 0.0
    %134 = vmatpush1.msra.mxu0 %v30
    %135 = vmatprep.subr.mxu0 0.0
    %136 = vmatpush1.msra.mxu0 %v31
    %137 = vmatprep.subr.mxu0 0.0
    %138 = vmatpush1.msra.mxu0 0.0
    %139 = vmatprep.subr.mxu0 0.0
    %140 = vmatpush1.msra.mxu0 0.0
    %141 = vmatprep.subr.mxu0 0.0
    %142 = vmatpush1.msra.mxu0 0.0
    %143 = vmatprep.subr.mxu0 0.0
    %144 = vmatpush1.msra.mxu0 0.0
    %145 = vmatprep.subr.mxu0 0.0
    %146 = vmatpush1.msra.mxu0 0.0
    %147 = vmatprep.subr.mxu0 0.0
    %148 = vmatpush1.msra.mxu0 0.0
    %149 = vmatprep.subr.mxu0 0.0
    %150 = vmatpush1.msra.mxu0 0.0
    %151 = vmatprep.subr.mxu0 0.0
    %152 = vmatpush1.msra.mxu0 0.0
    %153 = vmatprep.subr.mxu0 0.0
    %154 = vmatpush1.msra.mxu0 0.0
    %155 = vmatprep.subr.mxu0 0.0
    %156 = vmatpush1.msra.mxu0 0.0
    %157 = vmatprep.subr.mxu0 0.0
    %158 = vmatpush1.msra.mxu0 0.0
    %159 = vmatprep.subr.mxu0 0.0
    %160 = vmatpush1.msra.mxu0 0.0
    %161 = vmatprep.subr.mxu0 0.0
    %162 = vmatpush1.msra.mxu0 0.0
    %163 = vmatprep.subr.mxu0 0.0
    %164 = vmatpush1.msra.mxu0 0.0
    %165 = vmatprep.subr.mxu0 0.0
    %166 = vmatpush1.msra.mxu0 0.0
    %167 = vmatprep.subr.mxu0 0.0
    %168 = vmatpush1.msra.mxu0 0.0
    %169 = vmatprep.subr.mxu0 0.0
    %170 = vmatpush1.msra.mxu0 0.0
    %171 = vmatprep.subr.mxu0 0.0
    %172 = vmatpush1.msra.mxu0 0.0
    %173 = vmatprep.subr.mxu0 0.0
    %174 = vmatpush1.msra.mxu0 0.0
    %175 = vmatprep.subr.mxu0 0.0
    %176 = vmatpush1.msra.mxu0 0.0
    %177 = vmatprep.subr.mxu0 0.0
    %178 = vmatpush1.msra.mxu0 0.0
    %179 = vmatprep.subr.mxu0 0.0
    %180 = vmatpush1.msra.mxu0 0.0
    %181 = vmatprep.subr.mxu0 0.0
    %182 = vmatpush1.msra.mxu0 0.0
    %183 = vmatprep.subr.mxu0 0.0
    %184 = vmatpush1.msra.mxu0 0.0
    %185 = vmatprep.subr.mxu0 0.0
    %186 = vmatpush1.msra.mxu0 0.0
    %187 = vmatprep.subr.mxu0 0.0
    %188 = vmatpush1.msra.mxu0 0.0
    %189 = vmatprep.subr.mxu0 0.0
    %190 = vmatpush1.msra.mxu0 0.0
    %191 = vmatprep.subr.mxu0 0.0
    %192 = vmatpush1.msra.mxu0 0.0
    %193 = vmatprep.mubr.f32.mxu0 0.0
    %194 = vmatmul.mubr.f32.gmra.mrb[0].mxu0 %v49
    %v195 = vpop.f32.mrb[0].mxu0
    %v196 = vadd.f32 0.0, %v195
    %v197 = vpop.f32.mrb[0].mxu0
    %198 = vmatprep.mubr.f32.mxu0 0.0
    %199 = vmatmul.mubr.f32.gmra.mrb[0].mxu0 %v52
    %v200 = vpop.f32.mrb[0].mxu0
    %v201 = vadd.f32 0.0, %v200
    %v202 = vpop.f32.mrb[0].mxu0
    %203 = vdwg.mxu0
    %vm204 = vcmask 1047680
    %205 = vrot.lane.b32.xlu0 %v196, 16
    %v206 = vpop.permute.xlu0 %205
    %v207 = vsel %vm204, %v206, %v196
    %208 = vrot.lane.b32.xlu0 %v201, 16
    %v209 = vpop.permute.xlu0 %208
    %v210 = vsel %vm204, %v209, %v201
    %211 = vrot.lane.b32.xlu0 %v207, 16
    %v212 = vpop.permute.xlu0 %211
    %213 = vrot.lane.b32.xlu0 %v210, 16
    %v214 = vpop.permute.xlu0 %213
    %v215 = vsel %vm204, %v212, %v196
    %v216 = vsel %vm204, %v214, %v201
    %v217 = vld [vmem:[%s1] sm:$0xff]
    %v218 = vld [vmem:[%s1 + $0x8] sm:$0xff]
    %v219 = vsel %vm44, 1, 0
    %vm220 = vcmp.eq.s32.totalorder %v219, 1
    %222 = vset.pattern.permute.xlu0 0
    %223 = vperm.xlu0 %222, %v217
    %v224 = vpop.permute.xlu0 %223
    %227 = vset.pattern.permute.xlu0 0
    %228 = vperm.xlu0 %227, %v218
    %v229 = vpop.permute.xlu0 %228
    %233 = vrot.lane.b32.xlu0 %v215, 113
    %v234 = vpop.permute.xlu0 %233
    %235 = vrot.lane.b32.xlu0 %v216, 113
    %v236 = vpop.permute.xlu0 %235
    %v239 = vsel %vm220, %v224, %v234
    %v240 = vsel %vm220, %v229, %v236
    %vm241 = vcmask 130048
    %v243 = vsel %vm241, %v35, 0
    %v246 = vsel %vm241, %v36, 0
    %248 = vmatprep.subr.mxu0 0.0
    %249 = vmatpush1.msra.mxu0 %v121
    %250 = vmatprep.subr.mxu0 0.0
    %251 = vmatpush1.msra.mxu0 %v126
    %252 = vmatprep.subr.mxu0 0.0
    %253 = vmatpush1.msra.mxu0 0.0
    %254 = vmatprep.subr.mxu0 0.0
    %255 = vmatpush1.msra.mxu0 0.0
    %256 = vmatprep.subr.mxu0 0.0
    %257 = vmatpush1.msra.mxu0 0.0
    %258 = vmatprep.subr.mxu0 0.0
    %259 = vmatpush1.msra.mxu0 0.0
    %260 = vmatprep.subr.mxu0 0.0
    %261 = vmatpush1.msra.mxu0 0.0
    %262 = vmatprep.subr.mxu0 0.0
    %263 = vmatpush1.msra.mxu0 0.0
    %264 = vmatprep.subr.mxu0 0.0
    %265 = vmatpush1.msra.mxu0 0.0
    %266 = vmatprep.subr.mxu0 0.0
    %267 = vmatpush1.msra.mxu0 0.0
    %268 = vmatprep.subr.mxu0 0.0
    %269 = vmatpush1.msra.mxu0 0.0
    %270 = vmatprep.subr.mxu0 0.0
    %271 = vmatpush1.msra.mxu0 0.0
    %272 = vmatprep.subr.mxu0 0.0
    %273 = vmatpush1.msra.mxu0 0.0
    %274 = vmatprep.subr.mxu0 0.0
    %275 = vmatpush1.msra.mxu0 0.0
    %276 = vmatprep.subr.mxu0 0.0
    %277 = vmatpush1.msra.mxu0 0.0
    %278 = vmatprep.subr.mxu0 0.0
    %279 = vmatpush1.msra.mxu0 0.0
    %280 = vmatprep.subr.mxu0 0.0
    %281 = vmatpush1.msra.mxu0 0.0
    %282 = vmatprep.subr.mxu0 0.0
    %283 = vmatpush1.msra.mxu0 0.0
    %284 = vmatprep.subr.mxu0 0.0
    %285 = vmatpush1.msra.mxu0 0.0
    %286 = vmatprep.subr.mxu0 0.0
    %287 = vmatpush1.msra.mxu0 0.0
    %288 = vmatprep.subr.mxu0 0.0
    %289 = vmatpush1.msra.mxu0 0.0
    %290 = vmatprep.subr.mxu0 0.0
    %291 = vmatpush1.msra.mxu0 0.0
    %292 = vmatprep.subr.mxu0 0.0
    %293 = vmatpush1.msra.mxu0 0.0
    %294 = vmatprep.subr.mxu0 0.0
    %295 = vmatpush1.msra.mxu0 0.0
    %296 = vmatprep.subr.mxu0 0.0
    %297 = vmatpush1.msra.mxu0 0.0
    %298 = vmatprep.subr.mxu0 0.0
    %299 = vmatpush1.msra.mxu0 0.0
    %300 = vmatprep.subr.mxu0 0.0
    %301 = vmatpush1.msra.mxu0 0.0
    %302 = vmatprep.subr.mxu0 0.0
    %303 = vmatpush1.msra.mxu0 0.0
    %304 = vmatprep.subr.mxu0 0.0
    %305 = vmatpush1.msra.mxu0 0.0
    %306 = vmatprep.subr.mxu0 0.0
    %307 = vmatpush1.msra.mxu0 0.0
    %308 = vmatprep.subr.mxu0 0.0
    %309 = vmatpush1.msra.mxu0 0.0
    %310 = vmatprep.subr.mxu0 0.0
    %311 = vmatpush1.msra.mxu0 0.0
    %312 = vmatprep.mubr.f32.mxu0 0.0
    %313 = vmatmul.mubr.f32.gmra.mrb[0].mxu0 %v243
    %v314 = vpop.f32.mrb[0].mxu0
    %v315 = vadd.f32 0.0, %v314
    %v316 = vpop.f32.mrb[0].mxu0
    %317 = vmatprep.mubr.f32.mxu0 0.0
    %318 = vmatmul.mubr.f32.gmra.mrb[0].mxu0 %v246
    %v319 = vpop.f32.mrb[0].mxu0
    %v320 = vadd.f32 0.0, %v319
    %v321 = vpop.f32.mrb[0].mxu0
    %322 = vdwg.mxu0
    %v324 = vsel %vm241, %v32, 0
    %v327 = vsel %vm241, %v33, 0
    %329 = vmatprep.subr.mxu0 0.0
    %330 = vmatpush1.msra.mxu0 %v239
    %331 = vmatprep.subr.mxu0 0.0
    %332 = vmatpush1.msra.mxu0 %v240
    %333 = vmatprep.subr.mxu0 0.0
    %334 = vmatpush1.msra.mxu0 0.0
    %335 = vmatprep.subr.mxu0 0.0
    %336 = vmatpush1.msra.mxu0 0.0
    %337 = vmatprep.subr.mxu0 0.0
    %338 = vmatpush1.msra.mxu0 0.0
    %339 = vmatprep.subr.mxu0 0.0
    %340 = vmatpush1.msra.mxu0 0.0
    %341 = vmatprep.subr.mxu0 0.0
    %342 = vmatpush1.msra.mxu0 0.0
    %343 = vmatprep.subr.mxu0 0.0
    %344 = vmatpush1.msra.mxu0 0.0
    %345 = vmatprep.subr.mxu0 0.0
    %346 = vmatpush1.msra.mxu0 0.0
    %347 = vmatprep.subr.mxu0 0.0
    %348 = vmatpush1.msra.mxu0 0.0
    %349 = vmatprep.subr.mxu0 0.0
    %350 = vmatpush1.msra.mxu0 0.0
    %351 = vmatprep.subr.mxu0 0.0
    %352 = vmatpush1.msra.mxu0 0.0
    %353 = vmatprep.subr.mxu0 0.0
    %354 = vmatpush1.msra.mxu0 0.0
    %355 = vmatprep.subr.mxu0 0.0
    %356 = vmatpush1.msra.mxu0 0.0
    %357 = vmatprep.subr.mxu0 0.0
    %358 = vmatpush1.msra.mxu0 0.0
    %359 = vmatprep.subr.mxu0 0.0
    %360 = vmatpush1.msra.mxu0 0.0
    %361 = vmatprep.subr.mxu0 0.0
    %362 = vmatpush1.msra.mxu0 0.0
    %363 = vmatprep.subr.mxu0 0.0
    %364 = vmatpush1.msra.mxu0 0.0
    %365 = vmatprep.subr.mxu0 0.0
    %366 = vmatpush1.msra.mxu0 0.0
    %367 = vmatprep.subr.mxu0 0.0
    %368 = vmatpush1.msra.mxu0 0.0
    %369 = vmatprep.subr.mxu0 0.0
    %370 = vmatpush1.msra.mxu0 0.0
    %371 = vmatprep.subr.mxu0 0.0
    %372 = vmatpush1.msra.mxu0 0.0
    %373 = vmatprep.subr.mxu0 0.0
    %374 = vmatpush1.msra.mxu0 0.0
    %375 = vmatprep.subr.mxu0 0.0
    %376 = vmatpush1.msra.mxu0 0.0
    %377 = vmatprep.subr.mxu0 0.0
    %378 = vmatpush1.msra.mxu0 0.0
    %379 = vmatprep.subr.mxu0 0.0
    %380 = vmatpush1.msra.mxu0 0.0
    %381 = vmatprep.subr.mxu0 0.0
    %382 = vmatpush1.msra.mxu0 0.0
    %383 = vmatprep.subr.mxu0 0.0
    %384 = vmatpush1.msra.mxu0 0.0
    %385 = vmatprep.subr.mxu0 0.0
    %386 = vmatpush1.msra.mxu0 0.0
    %387 = vmatprep.subr.mxu0 0.0
    %388 = vmatpush1.msra.mxu0 0.0
    %389 = vmatprep.subr.mxu0 0.0
    %390 = vmatpush1.msra.mxu0 0.0
    %391 = vmatprep.subr.mxu0 0.0
    %392 = vmatpush1.msra.mxu0 0.0
    %393 = vmatprep.mubr.f32.mxu0 0.0
    %394 = vmatmul.mubr.f32.gmra.mrb[0].mxu0 %v324
    %v395 = vpop.f32.mrb[0].mxu0
    %v396 = vadd.f32 %v315, %v395
    %v397 = vpop.f32.mrb[0].mxu0
    %398 = vmatprep.mubr.f32.mxu0 0.0
    %399 = vmatmul.mubr.f32.gmra.mrb[0].mxu0 %v327
    %v400 = vpop.f32.mrb[0].mxu0
    %v401 = vadd.f32 %v320, %v400
    %v402 = vpop.f32.mrb[0].mxu0
    %403 = vdwg.mxu0
    %v405 = vsel %vm241, %v38, 0
    %v408 = vsel %vm241, %v39, 0
    %410 = vmatprep.subr.mxu0 0.0
    %411 = vmatpush1.msra.mxu0 %v196
    %412 = vmatprep.subr.mxu0 0.0
    %413 = vmatpush1.msra.mxu0 %v201
    %414 = vmatprep.subr.mxu0 0.0
    %415 = vmatpush1.msra.mxu0 0.0
    %416 = vmatprep.subr.mxu0 0.0
    %417 = vmatpush1.msra.mxu0 0.0
    %418 = vmatprep.subr.mxu0 0.0
    %419 = vmatpush1.msra.mxu0 0.0
    %420 = vmatprep.subr.mxu0 0.0
    %421 = vmatpush1.msra.mxu0 0.0
    %422 = vmatprep.subr.mxu0 0.0
    %423 = vmatpush1.msra.mxu0 0.0
    %424 = vmatprep.subr.mxu0 0.0
    %425 = vmatpush1.msra.mxu0 0.0
    %426 = vmatprep.subr.mxu0 0.0
    %427 = vmatpush1.msra.mxu0 0.0
    %428 = vmatprep.subr.mxu0 0.0
    %429 = vmatpush1.msra.mxu0 0.0
    %430 = vmatprep.subr.mxu0 0.0
    %431 = vmatpush1.msra.mxu0 0.0
    %432 = vmatprep.subr.mxu0 0.0
    %433 = vmatpush1.msra.mxu0 0.0
    %434 = vmatprep.subr.mxu0 0.0
    %435 = vmatpush1.msra.mxu0 0.0
    %436 = vmatprep.subr.mxu0 0.0
    %437 = vmatpush1.msra.mxu0 0.0
    %438 = vmatprep.subr.mxu0 0.0
    %439 = vmatpush1.msra.mxu0 0.0
    %440 = vmatprep.subr.mxu0 0.0
    %441 = vmatpush1.msra.mxu0 0.0
    %442 = vmatprep.subr.mxu0 0.0
    %443 = vmatpush1.msra.mxu0 0.0
    %444 = vmatprep.subr.mxu0 0.0
    %445 = vmatpush1.msra.mxu0 0.0
    %446 = vmatprep.subr.mxu0 0.0
    %447 = vmatpush1.msra.mxu0 0.0
    %448 = vmatprep.subr.mxu0 0.0
    %449 = vmatpush1.msra.mxu0 0.0
    %450 = vmatprep.subr.mxu0 0.0
    %451 = vmatpush1.msra.mxu0 0.0
    %452 = vmatprep.subr.mxu0 0.0
    %453 = vmatpush1.msra.mxu0 0.0
    %454 = vmatprep.subr.mxu0 0.0
    %455 = vmatpush1.msra.mxu0 0.0
    %456 = vmatprep.subr.mxu0 0.0
    %457 = vmatpush1.msra.mxu0 0.0
    %458 = vmatprep.subr.mxu0 0.0
    %459 = vmatpush1.msra.mxu0 0.0
    %460 = vmatprep.subr.mxu0 0.0
    %461 = vmatpush1.msra.mxu0 0.0
    %462 = vmatprep.subr.mxu0 0.0
    %463 = vmatpush1.msra.mxu0 0.0
    %464 = vmatprep.subr.mxu0 0.0
    %465 = vmatpush1.msra.mxu0 0.0
    %466 = vmatprep.subr.mxu0 0.0
    %467 = vmatpush1.msra.mxu0 0.0
    %468 = vmatprep.subr.mxu0 0.0
    %469 = vmatpush1.msra.mxu0 0.0
    %470 = vmatprep.subr.mxu0 0.0
    %471 = vmatpush1.msra.mxu0 0.0
    %472 = vmatprep.subr.mxu0 0.0
    %473 = vmatpush1.msra.mxu0 0.0
    %474 = vmatprep.mubr.f32.mxu0 0.0
    %475 = vmatmul.mubr.f32.gmra.mrb[0].mxu0 %v405
    %v476 = vpop.f32.mrb[0].mxu0
    %v477 = vadd.f32 0.0, %v476
    %v478 = vpop.f32.mrb[0].mxu0
    %479 = vmatprep.mubr.f32.mxu0 0.0
    %480 = vmatmul.mubr.f32.gmra.mrb[0].mxu0 %v408
    %v481 = vpop.f32.mrb[0].mxu0
    %v482 = vadd.f32 0.0, %v481
    %v483 = vpop.f32.mrb[0].mxu0
    %484 = vdwg.mxu0
    %v485 = vadd.f32 %v396, %v477
    %v486 = vadd.f32 %v401, %v482
    %488 = vset.pattern.permute.xlu0 0
    %489 = vperm.xlu0 %488, %v40
    %v490 = vpop.permute.xlu0 %489
    %493 = vset.pattern.permute.xlu0 0
    %494 = vperm.xlu0 %493, %v41
    %v495 = vpop.permute.xlu0 %494
    %v497 = vadd.f32 %v485, %v490
    %v498 = vadd.f32 %v486, %v495
    %499 = vst.msk [vmem:[#allocation2] sm:$0xff] %vm241, %v497
    %500 = vst.msk [vmem:[#allocation2 + $0x8] sm:$0xff] %vm241, %v498
    %s501 = scalar_lea.vmem %s0, 16
    %v502 = vld [vmem:[%s501] sm:$0xff]
    %v503 = vld [vmem:[%s501 + $0x8] sm:$0xff]
    %v505 = vsel %vm47, %v502, 0
    %v508 = vsel %vm47, %v503, 0
    %510 = vmatprep.subr.mxu0 0.0
    %511 = vmatpush1.msra.mxu0 %v24
    %512 = vmatprep.subr.mxu0 0.0
    %513 = vmatpush1.msra.mxu0 %v25
    %514 = vmatprep.subr.mxu0 0.0
    %515 = vmatpush1.msra.mxu0 %v26
    %516 = vmatprep.subr.mxu0 0.0
    %517 = vmatpush1.msra.mxu0 %v27
    %518 = vmatprep.subr.mxu0 0.0
    %519 = vmatpush1.msra.mxu0 0.0
    %520 = vmatprep.subr.mxu0 0.0
    %521 = vmatpush1.msra.mxu0 0.0
    %522 = vmatprep.subr.mxu0 0.0
    %523 = vmatpush1.msra.mxu0 0.0
    %524 = vmatprep.subr.mxu0 0.0
    %525 = vmatpush1.msra.mxu0 0.0
    %526 = vmatprep.subr.mxu0 0.0
    %527 = vmatpush1.msra.mxu0 0.0
    %528 = vmatprep.subr.mxu0 0.0
    %529 = vmatpush1.msra.mxu0 0.0
    %530 = vmatprep.subr.mxu0 0.0
    %531 = vmatpush1.msra.mxu0 0.0
    %532 = vmatprep.subr.mxu0 0.0
    %533 = vmatpush1.msra.mxu0 0.0
    %534 = vmatprep.subr.mxu0 0.0
    %535 = vmatpush1.msra.mxu0 0.0
    %536 = vmatprep.subr.mxu0 0.0
    %537 = vmatpush1.msra.mxu0 0.0
    %538 = vmatprep.subr.mxu0 0.0
    %539 = vmatpush1.msra.mxu0 0.0
    %540 = vmatprep.subr.mxu0 0.0
    %541 = vmatpush1.msra.mxu0 0.0
    %542 = vmatprep.subr.mxu0 0.0
    %543 = vmatpush1.msra.mxu0 0.0
    %544 = vmatprep.subr.mxu0 0.0
    %545 = vmatpush1.msra.mxu0 0.0
    %546 = vmatprep.subr.mxu0 0.0
    %547 = vmatpush1.msra.mxu0 0.0
    %548 = vmatprep.subr.mxu0 0.0
    %549 = vmatpush1.msra.mxu0 0.0
    %550 = vmatprep.subr.mxu0 0.0
    %551 = vmatpush1.msra.mxu0 0.0
    %552 = vmatprep.subr.mxu0 0.0
    %553 = vmatpush1.msra.mxu0 0.0
    %554 = vmatprep.subr.mxu0 0.0
    %555 = vmatpush1.msra.mxu0 0.0
    %556 = vmatprep.subr.mxu0 0.0
    %557 = vmatpush1.msra.mxu0 0.0
    %558 = vmatprep.subr.mxu0 0.0
    %559 = vmatpush1.msra.mxu0 0.0
    %560 = vmatprep.subr.mxu0 0.0
    %561 = vmatpush1.msra.mxu0 0.0
    %562 = vmatprep.subr.mxu0 0.0
    %563 = vmatpush1.msra.mxu0 0.0
    %564 = vmatprep.subr.mxu0 0.0
    %565 = vmatpush1.msra.mxu0 0.0
    %566 = vmatprep.subr.mxu0 0.0
    %567 = vmatpush1.msra.mxu0 0.0
    %568 = vmatprep.subr.mxu0 0.0
    %569 = vmatpush1.msra.mxu0 0.0
    %570 = vmatprep.subr.mxu0 0.0
    %571 = vmatpush1.msra.mxu0 0.0
    %572 = vmatprep.subr.mxu0 0.0
    %573 = vmatpush1.msra.mxu0 0.0
    %574 = vmatprep.mubr.f32.mxu0 0.0
    %575 = vmatmul.mubr.f32.gmra.mrb[0].mxu0 %v505
    %v576 = vpop.f32.mrb[0].mxu0
    %v577 = vadd.f32 0.0, %v576
    %v578 = vpop.f32.mrb[0].mxu0
    %579 = vmatprep.mubr.f32.mxu0 0.0
    %580 = vmatmul.mubr.f32.gmra.mrb[0].mxu0 %v508
    %v581 = vpop.f32.mrb[0].mxu0
    %v582 = vadd.f32 0.0, %v581
    %v583 = vpop.f32.mrb[0].mxu0
    %584 = vdwg.mxu0
    %585 = vmatprep.subr.mxu0 0.0
    %586 = vmatpush1.msra.mxu0 %v28
    %587 = vmatprep.subr.mxu0 0.0
    %588 = vmatpush1.msra.mxu0 %v29
    %589 = vmatprep.subr.mxu0 0.0
    %590 = vmatpush1.msra.mxu0 %v30
    %591 = vmatprep.subr.mxu0 0.0
    %592 = vmatpush1.msra.mxu0 %v31
    %593 = vmatprep.subr.mxu0 0.0
    %594 = vmatpush1.msra.mxu0 0.0
    %595 = vmatprep.subr.mxu0 0.0
    %596 = vmatpush1.msra.mxu0 0.0
    %597 = vmatprep.subr.mxu0 0.0
    %598 = vmatpush1.msra.mxu0 0.0
    %599 = vmatprep.subr.mxu0 0.0
    %600 = vmatpush1.msra.mxu0 0.0
    %601 = vmatprep.subr.mxu0 0.0
    %602 = vmatpush1.msra.mxu0 0.0
    %603 = vmatprep.subr.mxu0 0.0
    %604 = vmatpush1.msra.mxu0 0.0
    %605 = vmatprep.subr.mxu0 0.0
    %606 = vmatpush1.msra.mxu0 0.0
    %607 = vmatprep.subr.mxu0 0.0
    %608 = vmatpush1.msra.mxu0 0.0
    %609 = vmatprep.subr.mxu0 0.0
    %610 = vmatpush1.msra.mxu0 0.0
    %611 = vmatprep.subr.mxu0 0.0
    %612 = vmatpush1.msra.mxu0 0.0
    %613 = vmatprep.subr.mxu0 0.0
    %614 = vmatpush1.msra.mxu0 0.0
    %615 = vmatprep.subr.mxu0 0.0
    %616 = vmatpush1.msra.mxu0 0.0
    %617 = vmatprep.subr.mxu0 0.0
    %618 = vmatpush1.msra.mxu0 0.0
    %619 = vmatprep.subr.mxu0 0.0
    %620 = vmatpush1.msra.mxu0 0.0
    %621 = vmatprep.subr.mxu0 0.0
    %622 = vmatpush1.msra.mxu0 0.0
    %623 = vmatprep.subr.mxu0 0.0
    %624 = vmatpush1.msra.mxu0 0.0
    %625 = vmatprep.subr.mxu0 0.0
    %626 = vmatpush1.msra.mxu0 0.0
    %627 = vmatprep.subr.mxu0 0.0
    %628 = vmatpush1.msra.mxu0 0.0
    %629 = vmatprep.subr.mxu0 0.0
    %630 = vmatpush1.msra.mxu0 0.0
    %631 = vmatprep.subr.mxu0 0.0
    %632 = vmatpush1.msra.mxu0 0.0
    %633 = vmatprep.subr.mxu0 0.0
    %634 = vmatpush1.msra.mxu0 0.0
    %635 = vmatprep.subr.mxu0 0.0
    %636 = vmatpush1.msra.mxu0 0.0
    %637 = vmatprep.subr.mxu0 0.0
    %638 = vmatpush1.msra.mxu0 0.0
    %639 = vmatprep.subr.mxu0 0.0
    %640 = vmatpush1.msra.mxu0 0.0
    %641 = vmatprep.subr.mxu0 0.0
    %642 = vmatpush1.msra.mxu0 0.0
    %643 = vmatprep.subr.mxu0 0.0
    %644 = vmatpush1.msra.mxu0 0.0
    %645 = vmatprep.subr.mxu0 0.0
    %646 = vmatpush1.msra.mxu0 0.0
    %647 = vmatprep.subr.mxu0 0.0
    %648 = vmatpush1.msra.mxu0 0.0
    %649 = vmatprep.mubr.f32.mxu0 0.0
    %650 = vmatmul.mubr.f32.gmra.mrb[0].mxu0 %v505
    %v651 = vpop.f32.mrb[0].mxu0
    %v652 = vadd.f32 0.0, %v651
    %v653 = vpop.f32.mrb[0].mxu0
    %654 = vmatprep.mubr.f32.mxu0 0.0
    %655 = vmatmul.mubr.f32.gmra.mrb[0].mxu0 %v508
    %v656 = vpop.f32.mrb[0].mxu0
    %v657 = vadd.f32 0.0, %v656
    %v658 = vpop.f32.mrb[0].mxu0
    %659 = vdwg.mxu0
    %660 = vrot.lane.b32.xlu0 %v652, 16
    %v661 = vpop.permute.xlu0 %660
    %v662 = vsel %vm204, %v661, %v652
    %663 = vrot.lane.b32.xlu0 %v657, 16
    %v664 = vpop.permute.xlu0 %663
    %v665 = vsel %vm204, %v664, %v657
    %666 = vrot.lane.b32.xlu0 %v662, 16
    %v667 = vpop.permute.xlu0 %666
    %668 = vrot.lane.b32.xlu0 %v665, 16
    %v669 = vpop.permute.xlu0 %668
    %v670 = vsel %vm204, %v667, %v652
    %v671 = vsel %vm204, %v669, %v657
    %s672 = scalar_lea.vmem %s1, 16
    %v673 = vld [vmem:[%s672] sm:$0xff]
    %v674 = vld [vmem:[%s672 + $0x8] sm:$0xff]
    %676 = vset.pattern.permute.xlu0 0
    %677 = vperm.xlu0 %676, %v673
    %v678 = vpop.permute.xlu0 %677
    %681 = vset.pattern.permute.xlu0 0
    %682 = vperm.xlu0 %681, %v674
    %v683 = vpop.permute.xlu0 %682
    %687 = vrot.lane.b32.xlu0 %v670, 113
    %v688 = vpop.permute.xlu0 %687
    %689 = vrot.lane.b32.xlu0 %v671, 113
    %v690 = vpop.permute.xlu0 %689
    %v693 = vsel %vm220, %v678, %v688
    %v694 = vsel %vm220, %v683, %v690
    %695 = vmatprep.subr.mxu0 0.0
    %696 = vmatpush1.msra.mxu0 %v577
    %697 = vmatprep.subr.mxu0 0.0
    %698 = vmatpush1.msra.mxu0 %v582
    %699 = vmatprep.subr.mxu0 0.0
    %700 = vmatpush1.msra.mxu0 0.0
    %701 = vmatprep.subr.mxu0 0.0
    %702 = vmatpush1.msra.mxu0 0.0
    %703 = vmatprep.subr.mxu0 0.0
    %704 = vmatpush1.msra.mxu0 0.0
    %705 = vmatprep.subr.mxu0 0.0
    %706 = vmatpush1.msra.mxu0 0.0
    %707 = vmatprep.subr.mxu0 0.0
    %708 = vmatpush1.msra.mxu0 0.0
    %709 = vmatprep.subr.mxu0 0.0
    %710 = vmatpush1.msra.mxu0 0.0
    %711 = vmatprep.subr.mxu0 0.0
    %712 = vmatpush1.msra.mxu0 0.0
    %713 = vmatprep.subr.mxu0 0.0
    %714 = vmatpush1.msra.mxu0 0.0
    %715 = vmatprep.subr.mxu0 0.0
    %716 = vmatpush1.msra.mxu0 0.0
    %717 = vmatprep.subr.mxu0 0.0
    %718 = vmatpush1.msra.mxu0 0.0
    %719 = vmatprep.subr.mxu0 0.0
    %720 = vmatpush1.msra.mxu0 0.0
    %721 = vmatprep.subr.mxu0 0.0
    %722 = vmatpush1.msra.mxu0 0.0
    %723 = vmatprep.subr.mxu0 0.0
    %724 = vmatpush1.msra.mxu0 0.0
    %725 = vmatprep.subr.mxu0 0.0
    %726 = vmatpush1.msra.mxu0 0.0
    %727 = vmatprep.subr.mxu0 0.0
    %728 = vmatpush1.msra.mxu0 0.0
    %729 = vmatprep.subr.mxu0 0.0
    %730 = vmatpush1.msra.mxu0 0.0
    %731 = vmatprep.subr.mxu0 0.0
    %732 = vmatpush1.msra.mxu0 0.0
    %733 = vmatprep.subr.mxu0 0.0
    %734 = vmatpush1.msra.mxu0 0.0
    %735 = vmatprep.subr.mxu0 0.0
    %736 = vmatpush1.msra.mxu0 0.0
    %737 = vmatprep.subr.mxu0 0.0
    %738 = vmatpush1.msra.mxu0 0.0
    %739 = vmatprep.subr.mxu0 0.0
    %740 = vmatpush1.msra.mxu0 0.0
    %741 = vmatprep.subr.mxu0 0.0
    %742 = vmatpush1.msra.mxu0 0.0
    %743 = vmatprep.subr.mxu0 0.0
    %744 = vmatpush1.msra.mxu0 0.0
    %745 = vmatprep.subr.mxu0 0.0
    %746 = vmatpush1.msra.mxu0 0.0
    %747 = vmatprep.subr.mxu0 0.0
    %748 = vmatpush1.msra.mxu0 0.0
    %749 = vmatprep.subr.mxu0 0.0
    %750 = vmatpush1.msra.mxu0 0.0
    %751 = vmatprep.subr.mxu0 0.0
    %752 = vmatpush1.msra.mxu0 0.0
    %753 = vmatprep.subr.mxu0 0.0
    %754 = vmatpush1.msra.mxu0 0.0
    %755 = vmatprep.subr.mxu0 0.0
    %756 = vmatpush1.msra.mxu0 0.0
    %757 = vmatprep.subr.mxu0 0.0
    %758 = vmatpush1.msra.mxu0 0.0
    %759 = vmatprep.mubr.f32.mxu0 0.0
    %760 = vmatmul.mubr.f32.gmra.mrb[0].mxu0 %v243
    %v761 = vpop.f32.mrb[0].mxu0
    %v762 = vadd.f32 0.0, %v761
    %v763 = vpop.f32.mrb[0].mxu0
    %764 = vmatprep.mubr.f32.mxu0 0.0
    %765 = vmatmul.mubr.f32.gmra.mrb[0].mxu0 %v246
    %v766 = vpop.f32.mrb[0].mxu0
    %v767 = vadd.f32 0.0, %v766
    %v768 = vpop.f32.mrb[0].mxu0
    %769 = vdwg.mxu0
    %770 = vmatprep.subr.mxu0 0.0
    %771 = vmatpush1.msra.mxu0 %v693
    %772 = vmatprep.subr.mxu0 0.0
    %773 = vmatpush1.msra.mxu0 %v694
    %774 = vmatprep.subr.mxu0 0.0
    %775 = vmatpush1.msra.mxu0 0.0
    %776 = vmatprep.subr.mxu0 0.0
    %777 = vmatpush1.msra.mxu0 0.0
    %778 = vmatprep.subr.mxu0 0.0
    %779 = vmatpush1.msra.mxu0 0.0
    %780 = vmatprep.subr.mxu0 0.0
    %781 = vmatpush1.msra.mxu0 0.0
    %782 = vmatprep.subr.mxu0 0.0
    %783 = vmatpush1.msra.mxu0 0.0
    %784 = vmatprep.subr.mxu0 0.0
    %785 = vmatpush1.msra.mxu0 0.0
    %786 = vmatprep.subr.mxu0 0.0
    %787 = vmatpush1.msra.mxu0 0.0
    %788 = vmatprep.subr.mxu0 0.0
    %789 = vmatpush1.msra.mxu0 0.0
    %790 = vmatprep.subr.mxu0 0.0
    %791 = vmatpush1.msra.mxu0 0.0
    %792 = vmatprep.subr.mxu0 0.0
    %793 = vmatpush1.msra.mxu0 0.0
    %794 = vmatprep.subr.mxu0 0.0
    %795 = vmatpush1.msra.mxu0 0.0
    %796 = vmatprep.subr.mxu0 0.0
    %797 = vmatpush1.msra.mxu0 0.0
    %798 = vmatprep.subr.mxu0 0.0
    %799 = vmatpush1.msra.mxu0 0.0
    %800 = vmatprep.subr.mxu0 0.0
    %801 = vmatpush1.msra.mxu0 0.0
    %802 = vmatprep.subr.mxu0 0.0
    %803 = vmatpush1.msra.mxu0 0.0
    %804 = vmatprep.subr.mxu0 0.0
    %805 = vmatpush1.msra.mxu0 0.0
    %806 = vmatprep.subr.mxu0 0.0
    %807 = vmatpush1.msra.mxu0 0.0
    %808 = vmatprep.subr.mxu0 0.0
    %809 = vmatpush1.msra.mxu0 0.0
    %810 = vmatprep.subr.mxu0 0.0
    %811 = vmatpush1.msra.mxu0 0.0
    %812 = vmatprep.subr.mxu0 0.0
    %813 = vmatpush1.msra.mxu0 0.0
    %814 = vmatprep.subr.mxu0 0.0
    %815 = vmatpush1.msra.mxu0 0.0
    %816 = vmatprep.subr.mxu0 0.0
    %817 = vmatpush1.msra.mxu0 0.0
    %818 = vmatprep.subr.mxu0 0.0
    %819 = vmatpush1.msra.mxu0 0.0
    %820 = vmatprep.subr.mxu0 0.0
    %821 = vmatpush1.msra.mxu0 0.0
    %822 = vmatprep.subr.mxu0 0.0
    %823 = vmatpush1.msra.mxu0 0.0
    %824 = vmatprep.subr.mxu0 0.0
    %825 = vmatpush1.msra.mxu0 0.0
    %826 = vmatprep.subr.mxu0 0.0
    %827 = vmatpush1.msra.mxu0 0.0
    %828 = vmatprep.subr.mxu0 0.0
    %829 = vmatpush1.msra.mxu0 0.0
    %830 = vmatprep.subr.mxu0 0.0
    %831 = vmatpush1.msra.mxu0 0.0
    %832 = vmatprep.subr.mxu0 0.0
    %833 = vmatpush1.msra.mxu0 0.0
    %834 = vmatprep.mubr.f32.mxu0 0.0
    %835 = vmatmul.mubr.f32.gmra.mrb[0].mxu0 %v324
    %v836 = vpop.f32.mrb[0].mxu0
    %v837 = vadd.f32 %v762, %v836
    %v838 = vpop.f32.mrb[0].mxu0
    %839 = vmatprep.mubr.f32.mxu0 0.0
    %840 = vmatmul.mubr.f32.gmra.mrb[0].mxu0 %v327
    %v841 = vpop.f32.mrb[0].mxu0
    %v842 = vadd.f32 %v767, %v841
    %v843 = vpop.f32.mrb[0].mxu0
    %844 = vdwg.mxu0
    %845 = vmatprep.subr.mxu0 0.0
    %846 = vmatpush1.msra.mxu0 %v652
    %847 = vmatprep.subr.mxu0 0.0
    %848 = vmatpush1.msra.mxu0 %v657
    %849 = vmatprep.subr.mxu0 0.0
    %850 = vmatpush1.msra.mxu0 0.0
    %851 = vmatprep.subr.mxu0 0.0
    %852 = vmatpush1.msra.mxu0 0.0
    %853 = vmatprep.subr.mxu0 0.0
    %854 = vmatpush1.msra.mxu0 0.0
    %855 = vmatprep.subr.mxu0 0.0
    %856 = vmatpush1.msra.mxu0 0.0
    %857 = vmatprep.subr.mxu0 0.0
    %858 = vmatpush1.msra.mxu0 0.0
    %859 = vmatprep.subr.mxu0 0.0
    %860 = vmatpush1.msra.mxu0 0.0
    %861 = vmatprep.subr.mxu0 0.0
    %862 = vmatpush1.msra.mxu0 0.0
    %863 = vmatprep.subr.mxu0 0.0
    %864 = vmatpush1.msra.mxu0 0.0
    %865 = vmatprep.subr.mxu0 0.0
    %866 = vmatpush1.msra.mxu0 0.0
    %867 = vmatprep.subr.mxu0 0.0
    %868 = vmatpush1.msra.mxu0 0.0
    %869 = vmatprep.subr.mxu0 0.0
    %870 = vmatpush1.msra.mxu0 0.0
    %871 = vmatprep.subr.mxu0 0.0
    %872 = vmatpush1.msra.mxu0 0.0
    %873 = vmatprep.subr.mxu0 0.0
    %874 = vmatpush1.msra.mxu0 0.0
    %875 = vmatprep.subr.mxu0 0.0
    %876 = vmatpush1.msra.mxu0 0.0
    %877 = vmatprep.subr.mxu0 0.0
    %878 = vmatpush1.msra.mxu0 0.0
    %879 = vmatprep.subr.mxu0 0.0
    %880 = vmatpush1.msra.mxu0 0.0
    %881 = vmatprep.subr.mxu0 0.0
    %882 = vmatpush1.msra.mxu0 0.0
    %883 = vmatprep.subr.mxu0 0.0
    %884 = vmatpush1.msra.mxu0 0.0
    %885 = vmatprep.subr.mxu0 0.0
    %886 = vmatpush1.msra.mxu0 0.0
    %887 = vmatprep.subr.mxu0 0.0
    %888 = vmatpush1.msra.mxu0 0.0
    %889 = vmatprep.subr.mxu0 0.0
    %890 = vmatpush1.msra.mxu0 0.0
    %891 = vmatprep.subr.mxu0 0.0
    %892 = vmatpush1.msra.mxu0 0.0
    %893 = vmatprep.subr.mxu0 0.0
    %894 = vmatpush1.msra.mxu0 0.0
    %895 = vmatprep.subr.mxu0 0.0
    %896 = vmatpush1.msra.mxu0 0.0
    %897 = vmatprep.subr.mxu0 0.0
    %898 = vmatpush1.msra.mxu0 0.0
    %899 = vmatprep.subr.mxu0 0.0
    %900 = vmatpush1.msra.mxu0 0.0
    %901 = vmatprep.subr.mxu0 0.0
    %902 = vmatpush1.msra.mxu0 0.0
    %903 = vmatprep.subr.mxu0 0.0
    %904 = vmatpush1.msra.mxu0 0.0
    %905 = vmatprep.subr.mxu0 0.0
    %906 = vmatpush1.msra.mxu0 0.0
    %907 = vmatprep.subr.mxu0 0.0
    %908 = vmatpush1.msra.mxu0 0.0
    %909 = vmatprep.mubr.f32.mxu0 0.0
    %910 = vmatmul.mubr.f32.gmra.mrb[0].mxu0 %v405
    %v911 = vpop.f32.mrb[0].mxu0
    %v912 = vadd.f32 0.0, %v911
    %v913 = vpop.f32.mrb[0].mxu0
    %914 = vmatprep.mubr.f32.mxu0 0.0
    %915 = vmatmul.mubr.f32.gmra.mrb[0].mxu0 %v408
    %v916 = vpop.f32.mrb[0].mxu0
    %v917 = vadd.f32 0.0, %v916
    %v918 = vpop.f32.mrb[0].mxu0
    %919 = vdwg.mxu0
    %v920 = vadd.f32 %v837, %v912
    %v921 = vadd.f32 %v842, %v917
    %v922 = vadd.f32 %v920, %v490
    %v923 = vadd.f32 %v921, %v495
    %s924 = scalar_lea.vmem [#allocation2], 16
    %925 = vst.msk [vmem:[%s924] sm:$0xff] %vm241, %v922
    %926 = vst.msk [vmem:[%s924 + $0x8] sm:$0xff] %vm241, %v923
    %s927 = scalar_lea.vmem %s0, 32
    %v928 = vld [vmem:[%s927] sm:$0xff]
    %v929 = vld [vmem:[%s927 + $0x8] sm:$0xff]
    %v931 = vsel %vm47, %v928, 0
    %v934 = vsel %vm47, %v929, 0
    %936 = vmatprep.subr.mxu0 0.0
    %937 = vmatpush1.msra.mxu0 %v24
    %938 = vmatprep.subr.mxu0 0.0
    %939 = vmatpush1.msra.mxu0 %v25
    %940 = vmatprep.subr.mxu0 0.0
    %941 = vmatpush1.msra.mxu0 %v26
    %942 = vmatprep.subr.mxu0 0.0
    %943 = vmatpush1.msra.mxu0 %v27
    %944 = vmatprep.subr.mxu0 0.0
    %945 = vmatpush1.msra.mxu0 0.0
    %946 = vmatprep.subr.mxu0 0.0
    %947 = vmatpush1.msra.mxu0 0.0
    %948 = vmatprep.subr.mxu0 0.0
    %949 = vmatpush1.msra.mxu0 0.0
    %950 = vmatprep.subr.mxu0 0.0
    %951 = vmatpush1.msra.mxu0 0.0
    %952 = vmatprep.subr.mxu0 0.0
    %953 = vmatpush1.msra.mxu0 0.0
    %954 = vmatprep.subr.mxu0 0.0
    %955 = vmatpush1.msra.mxu0 0.0
    %956 = vmatprep.subr.mxu0 0.0
    %957 = vmatpush1.msra.mxu0 0.0
    %958 = vmatprep.subr.mxu0 0.0
    %959 = vmatpush1.msra.mxu0 0.0
    %960 = vmatprep.subr.mxu0 0.0
    %961 = vmatpush1.msra.mxu0 0.0
    %962 = vmatprep.subr.mxu0 0.0
    %963 = vmatpush1.msra.mxu0 0.0
    %964 = vmatprep.subr.mxu0 0.0
    %965 = vmatpush1.msra.mxu0 0.0
    %966 = vmatprep.subr.mxu0 0.0
    %967 = vmatpush1.msra.mxu0 0.0
    %968 = vmatprep.subr.mxu0 0.0
    %969 = vmatpush1.msra.mxu0 0.0
    %970 = vmatprep.subr.mxu0 0.0
    %971 = vmatpush1.msra.mxu0 0.0
    %972 = vmatprep.subr.mxu0 0.0
    %973 = vmatpush1.msra.mxu0 0.0
    %974 = vmatprep.subr.mxu0 0.0
    %975 = vmatpush1.msra.mxu0 0.0
    %976 = vmatprep.subr.mxu0 0.0
    %977 = vmatpush1.msra.mxu0 0.0
    %978 = vmatprep.subr.mxu0 0.0
    %979 = vmatpush1.msra.mxu0 0.0
    %980 = vmatprep.subr.mxu0 0.0
    %981 = vmatpush1.msra.mxu0 0.0
    %982 = vmatprep.subr.mxu0 0.0
    %983 = vmatpush1.msra.mxu0 0.0
    %984 = vmatprep.subr.mxu0 0.0
    %985 = vmatpush1.msra.mxu0 0.0
    %986 = vmatprep.subr.mxu0 0.0
    %987 = vmatpush1.msra.mxu0 0.0
    %988 = vmatprep.subr.mxu0 0.0
    %989 = vmatpush1.msra.mxu0 0.0
    %990 = vmatprep.subr.mxu0 0.0
    %991 = vmatpush1.msra.mxu0 0.0
    %992 = vmatprep.subr.mxu0 0.0
    %993 = vmatpush1.msra.mxu0 0.0
    %994 = vmatprep.subr.mxu0 0.0
    %995 = vmatpush1.msra.mxu0 0.0
    %996 = vmatprep.subr.mxu0 0.0
    %997 = vmatpush1.msra.mxu0 0.0
    %998 = vmatprep.subr.mxu0 0.0
    %999 = vmatpush1.msra.mxu0 0.0
    %1000 = vmatprep.mubr.f32.mxu0 0.0
    %1001 = vmatmul.mubr.f32.gmra.mrb[0].mxu0 %v931
    %v1002 = vpop.f32.mrb[0].mxu0
    %v1003 = vadd.f32 0.0, %v1002
    %v1004 = vpop.f32.mrb[0].mxu0
    %1005 = vmatprep.mubr.f32.mxu0 0.0
    %1006 = vmatmul.mubr.f32.gmra.mrb[0].mxu0 %v934
    %v1007 = vpop.f32.mrb[0].mxu0
    %v1008 = vadd.f32 0.0, %v1007
    %v1009 = vpop.f32.mrb[0].mxu0
    %1010 = vdwg.mxu0
    %1011 = vmatprep.subr.mxu0 0.0
    %1012 = vmatpush1.msra.mxu0 %v28
    %1013 = vmatprep.subr.mxu0 0.0
    %1014 = vmatpush1.msra.mxu0 %v29
    %1015 = vmatprep.subr.mxu0 0.0
    %1016 = vmatpush1.msra.mxu0 %v30
    %1017 = vmatprep.subr.mxu0 0.0
    %1018 = vmatpush1.msra.mxu0 %v31
    %1019 = vmatprep.subr.mxu0 0.0
    %1020 = vmatpush1.msra.mxu0 0.0
    %1021 = vmatprep.subr.mxu0 0.0
    %1022 = vmatpush1.msra.mxu0 0.0
    %1023 = vmatprep.subr.mxu0 0.0
    %1024 = vmatpush1.msra.mxu0 0.0
    %1025 = vmatprep.subr.mxu0 0.0
    %1026 = vmatpush1.msra.mxu0 0.0
    %1027 = vmatprep.subr.mxu0 0.0
    %1028 = vmatpush1.msra.mxu0 0.0
    %1029 = vmatprep.subr.mxu0 0.0
    %1030 = vmatpush1.msra.mxu0 0.0
    %1031 = vmatprep.subr.mxu0 0.0
    %1032 = vmatpush1.msra.mxu0 0.0
    %1033 = vmatprep.subr.mxu0 0.0
    %1034 = vmatpush1.msra.mxu0 0.0
    %1035 = vmatprep.subr.mxu0 0.0
    %1036 = vmatpush1.msra.mxu0 0.0
    %1037 = vmatprep.subr.mxu0 0.0
    %1038 = vmatpush1.msra.mxu0 0.0
    %1039 = vmatprep.subr.mxu0 0.0
    %1040 = vmatpush1.msra.mxu0 0.0
    %1041 = vmatprep.subr.mxu0 0.0
    %1042 = vmatpush1.msra.mxu0 0.0
    %1043 = vmatprep.subr.mxu0 0.0
    %1044 = vmatpush1.msra.mxu0 0.0
    %1045 = vmatprep.subr.mxu0 0.0
    %1046 = vmatpush1.msra.mxu0 0.0
    %1047 = vmatprep.subr.mxu0 0.0
    %1048 = vmatpush1.msra.mxu0 0.0
    %1049 = vmatprep.subr.mxu0 0.0
    %1050 = vmatpush1.msra.mxu0 0.0
    %1051 = vmatprep.subr.mxu0 0.0
    %1052 = vmatpush1.msra.mxu0 0.0
    %1053 = vmatprep.subr.mxu0 0.0
    %1054 = vmatpush1.msra.mxu0 0.0
    %1055 = vmatprep.subr.mxu0 0.0
    %1056 = vmatpush1.msra.mxu0 0.0
    %1057 = vmatprep.subr.mxu0 0.0
    %1058 = vmatpush1.msra.mxu0 0.0
    %1059 = vmatprep.subr.mxu0 0.0
    %1060 = vmatpush1.msra.mxu0 0.0
    %1061 = vmatprep.subr.mxu0 0.0
    %1062 = vmatpush1.msra.mxu0 0.0
    %1063 = vmatprep.subr.mxu0 0.0
    %1064 = vmatpush1.msra.mxu0 0.0
    %1065 = vmatprep.subr.mxu0 0.0
    %1066 = vmatpush1.msra.mxu0 0.0
    %1067 = vmatprep.subr.mxu0 0.0
    %1068 = vmatpush1.msra.mxu0 0.0
    %1069 = vmatprep.subr.mxu0 0.0
    %1070 = vmatpush1.msra.mxu0 0.0
    %1071 = vmatprep.subr.mxu0 0.0
    %1072 = vmatpush1.msra.mxu0 0.0
    %1073 = vmatprep.subr.mxu0 0.0
    %1074 = vmatpush1.msra.mxu0 0.0
    %1075 = vmatprep.mubr.f32.mxu0 0.0
    %1076 = vmatmul.mubr.f32.gmra.mrb[0].mxu0 %v931
    %v1077 = vpop.f32.mrb[0].mxu0
    %v1078 = vadd.f32 0.0, %v1077
    %v1079 = vpop.f32.mrb[0].mxu0
    %1080 = vmatprep.mubr.f32.mxu0 0.0
    %1081 = vmatmul.mubr.f32.gmra.mrb[0].mxu0 %v934
    %v1082 = vpop.f32.mrb[0].mxu0
    %v1083 = vadd.f32 0.0, %v1082
    %v1084 = vpop.f32.mrb[0].mxu0
    %1085 = vdwg.mxu0
    %1086 = vrot.lane.b32.xlu0 %v1078, 16
    %v1087 = vpop.permute.xlu0 %1086
    %v1088 = vsel %vm204, %v1087, %v1078
    %1089 = vrot.lane.b32.xlu0 %v1083, 16
    %v1090 = vpop.permute.xlu0 %1089
    %v1091 = vsel %vm204, %v1090, %v1083
    %1092 = vrot.lane.b32.xlu0 %v1088, 16
    %v1093 = vpop.permute.xlu0 %1092
    %1094 = vrot.lane.b32.xlu0 %v1091, 16
    %v1095 = vpop.permute.xlu0 %1094
    %v1096 = vsel %vm204, %v1093, %v1078
    %v1097 = vsel %vm204, %v1095, %v1083
    %s1098 = scalar_lea.vmem %s1, 32
    %v1099 = vld [vmem:[%s1098] sm:$0xff]
    %v1100 = vld [vmem:[%s1098 + $0x8] sm:$0xff]
    %1102 = vset.pattern.permute.xlu0 0
    %1103 = vperm.xlu0 %1102, %v1099
    %v1104 = vpop.permute.xlu0 %1103
    %1107 = vset.pattern.permute.xlu0 0
    %1108 = vperm.xlu0 %1107, %v1100
    %v1109 = vpop.permute.xlu0 %1108
    %1113 = vrot.lane.b32.xlu0 %v1096, 113
    %v1114 = vpop.permute.xlu0 %1113
    %1115 = vrot.lane.b32.xlu0 %v1097, 113
    %v1116 = vpop.permute.xlu0 %1115
    %v1119 = vsel %vm220, %v1104, %v1114
    %v1120 = vsel %vm220, %v1109, %v1116
    %1121 = vmatprep.subr.mxu0 0.0
    %1122 = vmatpush1.msra.mxu0 %v1003
    %1123 = vmatprep.subr.mxu0 0.0
    %1124 = vmatpush1.msra.mxu0 %v1008
    %1125 = vmatprep.subr.mxu0 0.0
    %1126 = vmatpush1.msra.mxu0 0.0
    %1127 = vmatprep.subr.mxu0 0.0
    %1128 = vmatpush1.msra.mxu0 0.0
    %1129 = vmatprep.subr.mxu0 0.0
    %1130 = vmatpush1.msra.mxu0 0.0
    %1131 = vmatprep.subr.mxu0 0.0
    %1132 = vmatpush1.msra.mxu0 0.0
    %1133 = vmatprep.subr.mxu0 0.0
    %1134 = vmatpush1.msra.mxu0 0.0
    %1135 = vmatprep.subr.mxu0 0.0
    %1136 = vmatpush1.msra.mxu0 0.0
    %1137 = vmatprep.subr.mxu0 0.0
    %1138 = vmatpush1.msra.mxu0 0.0
    %1139 = vmatprep.subr.mxu0 0.0
    %1140 = vmatpush1.msra.mxu0 0.0
    %1141 = vmatprep.subr.mxu0 0.0
    %1142 = vmatpush1.msra.mxu0 0.0
    %1143 = vmatprep.subr.mxu0 0.0
    %1144 = vmatpush1.msra.mxu0 0.0
    %1145 = vmatprep.subr.mxu0 0.0
    %1146 = vmatpush1.msra.mxu0 0.0
    %1147 = vmatprep.subr.mxu0 0.0
    %1148 = vmatpush1.msra.mxu0 0.0
    %1149 = vmatprep.subr.mxu0 0.0
    %1150 = vmatpush1.msra.mxu0 0.0
    %1151 = vmatprep.subr.mxu0 0.0
    %1152 = vmatpush1.msra.mxu0 0.0
    %1153 = vmatprep.subr.mxu0 0.0
    %1154 = vmatpush1.msra.mxu0 0.0
    %1155 = vmatprep.subr.mxu0 0.0
    %1156 = vmatpush1.msra.mxu0 0.0
    %1157 = vmatprep.subr.mxu0 0.0
    %1158 = vmatpush1.msra.mxu0 0.0
    %1159 = vmatprep.subr.mxu0 0.0
    %1160 = vmatpush1.msra.mxu0 0.0
    %1161 = vmatprep.subr.mxu0 0.0
    %1162 = vmatpush1.msra.mxu0 0.0
    %1163 = vmatprep.subr.mxu0 0.0
    %1164 = vmatpush1.msra.mxu0 0.0
    %1165 = vmatprep.subr.mxu0 0.0
    %1166 = vmatpush1.msra.mxu0 0.0
    %1167 = vmatprep.subr.mxu0 0.0
    %1168 = vmatpush1.msra.mxu0 0.0
    %1169 = vmatprep.subr.mxu0 0.0
    %1170 = vmatpush1.msra.mxu0 0.0
    %1171 = vmatprep.subr.mxu0 0.0
    %1172 = vmatpush1.msra.mxu0 0.0
    %1173 = vmatprep.subr.mxu0 0.0
    %1174 = vmatpush1.msra.mxu0 0.0
    %1175 = vmatprep.subr.mxu0 0.0
    %1176 = vmatpush1.msra.mxu0 0.0
    %1177 = vmatprep.subr.mxu0 0.0
    %1178 = vmatpush1.msra.mxu0 0.0
    %1179 = vmatprep.subr.mxu0 0.0
    %1180 = vmatpush1.msra.mxu0 0.0
    %1181 = vmatprep.subr.mxu0 0.0
    %1182 = vmatpush1.msra.mxu0 0.0
    %1183 = vmatprep.subr.mxu0 0.0
    %1184 = vmatpush1.msra.mxu0 0.0
    %1185 = vmatprep.mubr.f32.mxu0 0.0
    %1186 = vmatmul.mubr.f32.gmra.mrb[0].mxu0 %v243
    %v1187 = vpop.f32.mrb[0].mxu0
    %v1188 = vadd.f32 0.0, %v1187
    %v1189 = vpop.f32.mrb[0].mxu0
    %1190 = vmatprep.mubr.f32.mxu0 0.0
    %1191 = vmatmul.mubr.f32.gmra.mrb[0].mxu0 %v246
    %v1192 = vpop.f32.mrb[0].mxu0
    %v1193 = vadd.f32 0.0, %v1192
    %v1194 = vpop.f32.mrb[0].mxu0
    %1195 = vdwg.mxu0
    %1196 = vmatprep.subr.mxu0 0.0
    %1197 = vmatpush1.msra.mxu0 %v1119
    %1198 = vmatprep.subr.mxu0 0.0
    %1199 = vmatpush1.msra.mxu0 %v1120
    %1200 = vmatprep.subr.mxu0 0.0
    %1201 = vmatpush1.msra.mxu0 0.0
    %1202 = vmatprep.subr.mxu0 0.0
    %1203 = vmatpush1.msra.mxu0 0.0
    %1204 = vmatprep.subr.mxu0 0.0
    %1205 = vmatpush1.msra.mxu0 0.0
    %1206 = vmatprep.subr.mxu0 0.0
    %1207 = vmatpush1.msra.mxu0 0.0
    %1208 = vmatprep.subr.mxu0 0.0
    %1209 = vmatpush1.msra.mxu0 0.0
    %1210 = vmatprep.subr.mxu0 0.0
    %1211 = vmatpush1.msra.mxu0 0.0
    %1212 = vmatprep.subr.mxu0 0.0
    %1213 = vmatpush1.msra.mxu0 0.0
    %1214 = vmatprep.subr.mxu0 0.0
    %1215 = vmatpush1.msra.mxu0 0.0
    %1216 = vmatprep.subr.mxu0 0.0
    %1217 = vmatpush1.msra.mxu0 0.0
    %1218 = vmatprep.subr.mxu0 0.0
    %1219 = vmatpush1.msra.mxu0 0.0
    %1220 = vmatprep.subr.mxu0 0.0
    %1221 = vmatpush1.msra.mxu0 0.0
    %1222 = vmatprep.subr.mxu0 0.0
    %1223 = vmatpush1.msra.mxu0 0.0
    %1224 = vmatprep.subr.mxu0 0.0
    %1225 = vmatpush1.msra.mxu0 0.0
    %1226 = vmatprep.subr.mxu0 0.0
    %1227 = vmatpush1.msra.mxu0 0.0
    %1228 = vmatprep.subr.mxu0 0.0
    %1229 = vmatpush1.msra.mxu0 0.0
    %1230 = vmatprep.subr.mxu0 0.0
    %1231 = vmatpush1.msra.mxu0 0.0
    %1232 = vmatprep.subr.mxu0 0.0
    %1233 = vmatpush1.msra.mxu0 0.0
    %1234 = vmatprep.subr.mxu0 0.0
    %1235 = vmatpush1.msra.mxu0 0.0
    %1236 = vmatprep.subr.mxu0 0.0
    %1237 = vmatpush1.msra.mxu0 0.0
    %1238 = vmatprep.subr.mxu0 0.0
    %1239 = vmatpush1.msra.mxu0 0.0
    %1240 = vmatprep.subr.mxu0 0.0
    %1241 = vmatpush1.msra.mxu0 0.0
    %1242 = vmatprep.subr.mxu0 0.0
    %1243 = vmatpush1.msra.mxu0 0.0
    %1244 = vmatprep.subr.mxu0 0.0
    %1245 = vmatpush1.msra.mxu0 0.0
    %1246 = vmatprep.subr.mxu0 0.0
    %1247 = vmatpush1.msra.mxu0 0.0
    %1248 = vmatprep.subr.mxu0 0.0
    %1249 = vmatpush1.msra.mxu0 0.0
    %1250 = vmatprep.subr.mxu0 0.0
    %1251 = vmatpush1.msra.mxu0 0.0
    %1252 = vmatprep.subr.mxu0 0.0
    %1253 = vmatpush1.msra.mxu0 0.0
    %1254 = vmatprep.subr.mxu0 0.0
    %1255 = vmatpush1.msra.mxu0 0.0
    %1256 = vmatprep.subr.mxu0 0.0
    %1257 = vmatpush1.msra.mxu0 0.0
    %1258 = vmatprep.subr.mxu0 0.0
    %1259 = vmatpush1.msra.mxu0 0.0
    %1260 = vmatprep.mubr.f32.mxu0 0.0
    %1261 = vmatmul.mubr.f32.gmra.mrb[0].mxu0 %v324
    %v1262 = vpop.f32.mrb[0].mxu0
    %v1263 = vadd.f32 %v1188, %v1262
    %v1264 = vpop.f32.mrb[0].mxu0
    %1265 = vmatprep.mubr.f32.mxu0 0.0
    %1266 = vmatmul.mubr.f32.gmra.mrb[0].mxu0 %v327
    %v1267 = vpop.f32.mrb[0].mxu0
    %v1268 = vadd.f32 %v1193, %v1267
    %v1269 = vpop.f32.mrb[0].mxu0
    %1270 = vdwg.mxu0
    %1271 = vmatprep.subr.mxu0 0.0
    %1272 = vmatpush1.msra.mxu0 %v1078
    %1273 = vmatprep.subr.mxu0 0.0
    %1274 = vmatpush1.msra.mxu0 %v1083
    %1275 = vmatprep.subr.mxu0 0.0
    %1276 = vmatpush1.msra.mxu0 0.0
    %1277 = vmatprep.subr.mxu0 0.0
    %1278 = vmatpush1.msra.mxu0 0.0
    %1279 = vmatprep.subr.mxu0 0.0
    %1280 = vmatpush1.msra.mxu0 0.0
    %1281 = vmatprep.subr.mxu0 0.0
    %1282 = vmatpush1.msra.mxu0 0.0
    %1283 = vmatprep.subr.mxu0 0.0
    %1284 = vmatpush1.msra.mxu0 0.0
    %1285 = vmatprep.subr.mxu0 0.0
    %1286 = vmatpush1.msra.mxu0 0.0
    %1287 = vmatprep.subr.mxu0 0.0
    %1288 = vmatpush1.msra.mxu0 0.0
    %1289 = vmatprep.subr.mxu0 0.0
    %1290 = vmatpush1.msra.mxu0 0.0
    %1291 = vmatprep.subr.mxu0 0.0
    %1292 = vmatpush1.msra.mxu0 0.0
    %1293 = vmatprep.subr.mxu0 0.0
    %1294 = vmatpush1.msra.mxu0 0.0
    %1295 = vmatprep.subr.mxu0 0.0
    %1296 = vmatpush1.msra.mxu0 0.0
    %1297 = vmatprep.subr.mxu0 0.0
    %1298 = vmatpush1.msra.mxu0 0.0
    %1299 = vmatprep.subr.mxu0 0.0
    %1300 = vmatpush1.msra.mxu0 0.0
    %1301 = vmatprep.subr.mxu0 0.0
    %1302 = vmatpush1.msra.mxu0 0.0
    %1303 = vmatprep.subr.mxu0 0.0
    %1304 = vmatpush1.msra.mxu0 0.0
    %1305 = vmatprep.subr.mxu0 0.0
    %1306 = vmatpush1.msra.mxu0 0.0
    %1307 = vmatprep.subr.mxu0 0.0
    %1308 = vmatpush1.msra.mxu0 0.0
    %1309 = vmatprep.subr.mxu0 0.0
    %1310 = vmatpush1.msra.mxu0 0.0
    %1311 = vmatprep.subr.mxu0 0.0
    %1312 = vmatpush1.msra.mxu0 0.0
    %1313 = vmatprep.subr.mxu0 0.0
    %1314 = vmatpush1.msra.mxu0 0.0
    %1315 = vmatprep.subr.mxu0 0.0
    %1316 = vmatpush1.msra.mxu0 0.0
    %1317 = vmatprep.subr.mxu0 0.0
    %1318 = vmatpush1.msra.mxu0 0.0
    %1319 = vmatprep.subr.mxu0 0.0
    %1320 = vmatpush1.msra.mxu0 0.0
    %1321 = vmatprep.subr.mxu0 0.0
    %1322 = vmatpush1.msra.mxu0 0.0
    %1323 = vmatprep.subr.mxu0 0.0
    %1324 = vmatpush1.msra.mxu0 0.0
    %1325 = vmatprep.subr.mxu0 0.0
    %1326 = vmatpush1.msra.mxu0 0.0
    %1327 = vmatprep.subr.mxu0 0.0
    %1328 = vmatpush1.msra.mxu0 0.0
    %1329 = vmatprep.subr.mxu0 0.0
    %1330 = vmatpush1.msra.mxu0 0.0
    %1331 = vmatprep.subr.mxu0 0.0
    %1332 = vmatpush1.msra.mxu0 0.0
    %1333 = vmatprep.subr.mxu0 0.0
    %1334 = vmatpush1.msra.mxu0 0.0
    %1335 = vmatprep.mubr.f32.mxu0 0.0
    %1336 = vmatmul.mubr.f32.gmra.mrb[0].mxu0 %v405
    %v1337 = vpop.f32.mrb[0].mxu0
    %v1338 = vadd.f32 0.0, %v1337
    %v1339 = vpop.f32.mrb[0].mxu0
    %1340 = vmatprep.mubr.f32.mxu0 0.0
    %1341 = vmatmul.mubr.f32.gmra.mrb[0].mxu0 %v408
    %v1342 = vpop.f32.mrb[0].mxu0
    %v1343 = vadd.f32 0.0, %v1342
    %v1344 = vpop.f32.mrb[0].mxu0
    %1345 = vdwg.mxu0
    %v1346 = vadd.f32 %v1263, %v1338
    %v1347 = vadd.f32 %v1268, %v1343
    %v1348 = vadd.f32 %v1346, %v490
    %v1349 = vadd.f32 %v1347, %v495
    %s1350 = scalar_lea.vmem [#allocation2], 32
    %1351 = vst.msk [vmem:[%s1350] sm:$0xff] %vm241, %v1348
    %1352 = vst.msk [vmem:[%s1350 + $0x8] sm:$0xff] %vm241, %v1349
    %s1353 = scalar_lea.vmem %s0, 48
    %v1354 = vld [vmem:[%s1353] sm:$0xff]
    %v1355 = vld [vmem:[%s1353 + $0x8] sm:$0xff]
    %v1357 = vsel %vm47, %v1354, 0
    %v1360 = vsel %vm47, %v1355, 0
    %1362 = vmatprep.subr.mxu0 0.0
    %1363 = vmatpush1.msra.mxu0 %v24
    %1364 = vmatprep.subr.mxu0 0.0
    %1365 = vmatpush1.msra.mxu0 %v25
    %1366 = vmatprep.subr.mxu0 0.0
    %1367 = vmatpush1.msra.mxu0 %v26
    %1368 = vmatprep.subr.mxu0 0.0
    %1369 = vmatpush1.msra.mxu0 %v27
    %1370 = vmatprep.subr.mxu0 0.0
    %1371 = vmatpush1.msra.mxu0 0.0
    %1372 = vmatprep.subr.mxu0 0.0
    %1373 = vmatpush1.msra.mxu0 0.0
    %1374 = vmatprep.subr.mxu0 0.0
    %1375 = vmatpush1.msra.mxu0 0.0
    %1376 = vmatprep.subr.mxu0 0.0
    %1377 = vmatpush1.msra.mxu0 0.0
    %1378 = vmatprep.subr.mxu0 0.0
    %1379 = vmatpush1.msra.mxu0 0.0
    %1380 = vmatprep.subr.mxu0 0.0
    %1381 = vmatpush1.msra.mxu0 0.0
    %1382 = vmatprep.subr.mxu0 0.0
    %1383 = vmatpush1.msra.mxu0 0.0
    %1384 = vmatprep.subr.mxu0 0.0
    %1385 = vmatpush1.msra.mxu0 0.0
    %1386 = vmatprep.subr.mxu0 0.0
    %1387 = vmatpush1.msra.mxu0 0.0
    %1388 = vmatprep.subr.mxu0 0.0
    %1389 = vmatpush1.msra.mxu0 0.0
    %1390 = vmatprep.subr.mxu0 0.0
    %1391 = vmatpush1.msra.mxu0 0.0
    %1392 = vmatprep.subr.mxu0 0.0
    %1393 = vmatpush1.msra.mxu0 0.0
    %1394 = vmatprep.subr.mxu0 0.0
    %1395 = vmatpush1.msra.mxu0 0.0
    %1396 = vmatprep.subr.mxu0 0.0
    %1397 = vmatpush1.msra.mxu0 0.0
    %1398 = vmatprep.subr.mxu0 0.0
    %1399 = vmatpush1.msra.mxu0 0.0
    %1400 = vmatprep.subr.mxu0 0.0
    %1401 = vmatpush1.msra.mxu0 0.0
    %1402 = vmatprep.subr.mxu0 0.0
    %1403 = vmatpush1.msra.mxu0 0.0
    %1404 = vmatprep.subr.mxu0 0.0
    %1405 = vmatpush1.msra.mxu0 0.0
    %1406 = vmatprep.subr.mxu0 0.0
    %1407 = vmatpush1.msra.mxu0 0.0
    %1408 = vmatprep.subr.mxu0 0.0
    %1409 = vmatpush1.msra.mxu0 0.0
    %1410 = vmatprep.subr.mxu0 0.0
    %1411 = vmatpush1.msra.mxu0 0.0
    %1412 = vmatprep.subr.mxu0 0.0
    %1413 = vmatpush1.msra.mxu0 0.0
    %1414 = vmatprep.subr.mxu0 0.0
    %1415 = vmatpush1.msra.mxu0 0.0
    %1416 = vmatprep.subr.mxu0 0.0
    %1417 = vmatpush1.msra.mxu0 0.0
    %1418 = vmatprep.subr.mxu0 0.0
    %1419 = vmatpush1.msra.mxu0 0.0
    %1420 = vmatprep.subr.mxu0 0.0
    %1421 = vmatpush1.msra.mxu0 0.0
    %1422 = vmatprep.subr.mxu0 0.0
    %1423 = vmatpush1.msra.mxu0 0.0
    %1424 = vmatprep.subr.mxu0 0.0
    %1425 = vmatpush1.msra.mxu0 0.0
    %1426 = vmatprep.mubr.f32.mxu0 0.0
    %1427 = vmatmul.mubr.f32.gmra.mrb[0].mxu0 %v1357
    %v1428 = vpop.f32.mrb[0].mxu0
    %v1429 = vadd.f32 0.0, %v1428
    %v1430 = vpop.f32.mrb[0].mxu0
    %1431 = vmatprep.mubr.f32.mxu0 0.0
    %1432 = vmatmul.mubr.f32.gmra.mrb[0].mxu0 %v1360
    %v1433 = vpop.f32.mrb[0].mxu0
    %v1434 = vadd.f32 0.0, %v1433
    %v1435 = vpop.f32.mrb[0].mxu0
    %1436 = vdwg.mxu0
    %1437 = vmatprep.subr.mxu0 0.0
    %1438 = vmatpush1.msra.mxu0 %v28
    %1439 = vmatprep.subr.mxu0 0.0
    %1440 = vmatpush1.msra.mxu0 %v29
    %1441 = vmatprep.subr.mxu0 0.0
    %1442 = vmatpush1.msra.mxu0 %v30
    %1443 = vmatprep.subr.mxu0 0.0
    %1444 = vmatpush1.msra.mxu0 %v31
    %1445 = vmatprep.subr.mxu0 0.0
    %1446 = vmatpush1.msra.mxu0 0.0
    %1447 = vmatprep.subr.mxu0 0.0
    %1448 = vmatpush1.msra.mxu0 0.0
    %1449 = vmatprep.subr.mxu0 0.0
    %1450 = vmatpush1.msra.mxu0 0.0
    %1451 = vmatprep.subr.mxu0 0.0
    %1452 = vmatpush1.msra.mxu0 0.0
    %1453 = vmatprep.subr.mxu0 0.0
    %1454 = vmatpush1.msra.mxu0 0.0
    %1455 = vmatprep.subr.mxu0 0.0
    %1456 = vmatpush1.msra.mxu0 0.0
    %1457 = vmatprep.subr.mxu0 0.0
    %1458 = vmatpush1.msra.mxu0 0.0
    %1459 = vmatprep.subr.mxu0 0.0
    %1460 = vmatpush1.msra.mxu0 0.0
    %1461 = vmatprep.subr.mxu0 0.0
    %1462 = vmatpush1.msra.mxu0 0.0
    %1463 = vmatprep.subr.mxu0 0.0
    %1464 = vmatpush1.msra.mxu0 0.0
    %1465 = vmatprep.subr.mxu0 0.0
    %1466 = vmatpush1.msra.mxu0 0.0
    %1467 = vmatprep.subr.mxu0 0.0
    %1468 = vmatpush1.msra.mxu0 0.0
    %1469 = vmatprep.subr.mxu0 0.0
    %1470 = vmatpush1.msra.mxu0 0.0
    %1471 = vmatprep.subr.mxu0 0.0
    %1472 = vmatpush1.msra.mxu0 0.0
    %1473 = vmatprep.subr.mxu0 0.0
    %1474 = vmatpush1.msra.mxu0 0.0
    %1475 = vmatprep.subr.mxu0 0.0
    %1476 = vmatpush1.msra.mxu0 0.0
    %1477 = vmatprep.subr.mxu0 0.0
    %1478 = vmatpush1.msra.mxu0 0.0
    %1479 = vmatprep.subr.mxu0 0.0
    %1480 = vmatpush1.msra.mxu0 0.0
    %1481 = vmatprep.subr.mxu0 0.0
    %1482 = vmatpush1.msra.mxu0 0.0
    %1483 = vmatprep.subr.mxu0 0.0
    %1484 = vmatpush1.msra.mxu0 0.0
    %1485 = vmatprep.subr.mxu0 0.0
    %1486 = vmatpush1.msra.mxu0 0.0
    %1487 = vmatprep.subr.mxu0 0.0
    %1488 = vmatpush1.msra.mxu0 0.0
    %1489 = vmatprep.subr.mxu0 0.0
    %1490 = vmatpush1.msra.mxu0 0.0
    %1491 = vmatprep.subr.mxu0 0.0
    %1492 = vmatpush1.msra.mxu0 0.0
    %1493 = vmatprep.subr.mxu0 0.0
    %1494 = vmatpush1.msra.mxu0 0.0
    %1495 = vmatprep.subr.mxu0 0.0
    %1496 = vmatpush1.msra.mxu0 0.0
    %1497 = vmatprep.subr.mxu0 0.0
    %1498 = vmatpush1.msra.mxu0 0.0
    %1499 = vmatprep.subr.mxu0 0.0
    %1500 = vmatpush1.msra.mxu0 0.0
    %1501 = vmatprep.mubr.f32.mxu0 0.0
    %1502 = vmatmul.mubr.f32.gmra.mrb[0].mxu0 %v1357
    %v1503 = vpop.f32.mrb[0].mxu0
    %v1504 = vadd.f32 0.0, %v1503
    %v1505 = vpop.f32.mrb[0].mxu0
    %1506 = vmatprep.mubr.f32.mxu0 0.0
    %1507 = vmatmul.mubr.f32.gmra.mrb[0].mxu0 %v1360
    %v1508 = vpop.f32.mrb[0].mxu0
    %v1509 = vadd.f32 0.0, %v1508
    %v1510 = vpop.f32.mrb[0].mxu0
    %1511 = vdwg.mxu0
    %1512 = vrot.lane.b32.xlu0 %v1504, 16
    %v1513 = vpop.permute.xlu0 %1512
    %v1514 = vsel %vm204, %v1513, %v1504
    %1515 = vrot.lane.b32.xlu0 %v1509, 16
    %v1516 = vpop.permute.xlu0 %1515
    %v1517 = vsel %vm204, %v1516, %v1509
    %1518 = vrot.lane.b32.xlu0 %v1514, 16
    %v1519 = vpop.permute.xlu0 %1518
    %1520 = vrot.lane.b32.xlu0 %v1517, 16
    %v1521 = vpop.permute.xlu0 %1520
    %v1522 = vsel %vm204, %v1519, %v1504
    %v1523 = vsel %vm204, %v1521, %v1509
    %s1524 = scalar_lea.vmem %s1, 48
    %v1525 = vld [vmem:[%s1524] sm:$0xff]
    %v1526 = vld [vmem:[%s1524 + $0x8] sm:$0xff]
    %1528 = vset.pattern.permute.xlu0 0
    %1529 = vperm.xlu0 %1528, %v1525
    %v1530 = vpop.permute.xlu0 %1529
    %1533 = vset.pattern.permute.xlu0 0
    %1534 = vperm.xlu0 %1533, %v1526
    %v1535 = vpop.permute.xlu0 %1534
    %1539 = vrot.lane.b32.xlu0 %v1522, 113
    %v1540 = vpop.permute.xlu0 %1539
    %1541 = vrot.lane.b32.xlu0 %v1523, 113
    %v1542 = vpop.permute.xlu0 %1541
    %v1545 = vsel %vm220, %v1530, %v1540
    %v1546 = vsel %vm220, %v1535, %v1542
    %1547 = vmatprep.subr.mxu0 0.0
    %1548 = vmatpush1.msra.mxu0 %v1429
    %1549 = vmatprep.subr.mxu0 0.0
    %1550 = vmatpush1.msra.mxu0 %v1434
    %1551 = vmatprep.subr.mxu0 0.0
    %1552 = vmatpush1.msra.mxu0 0.0
    %1553 = vmatprep.subr.mxu0 0.0
    %1554 = vmatpush1.msra.mxu0 0.0
    %1555 = vmatprep.subr.mxu0 0.0
    %1556 = vmatpush1.msra.mxu0 0.0
    %1557 = vmatprep.subr.mxu0 0.0
    %1558 = vmatpush1.msra.mxu0 0.0
    %1559 = vmatprep.subr.mxu0 0.0
    %1560 = vmatpush1.msra.mxu0 0.0
    %1561 = vmatprep.subr.mxu0 0.0
    %1562 = vmatpush1.msra.mxu0 0.0
    %1563 = vmatprep.subr.mxu0 0.0
    %1564 = vmatpush1.msra.mxu0 0.0
    %1565 = vmatprep.subr.mxu0 0.0
    %1566 = vmatpush1.msra.mxu0 0.0
    %1567 = vmatprep.subr.mxu0 0.0
    %1568 = vmatpush1.msra.mxu0 0.0
    %1569 = vmatprep.subr.mxu0 0.0
    %1570 = vmatpush1.msra.mxu0 0.0
    %1571 = vmatprep.subr.mxu0 0.0
    %1572 = vmatpush1.msra.mxu0 0.0
    %1573 = vmatprep.subr.mxu0 0.0
    %1574 = vmatpush1.msra.mxu0 0.0
    %1575 = vmatprep.subr.mxu0 0.0
    %1576 = vmatpush1.msra.mxu0 0.0
    %1577 = vmatprep.subr.mxu0 0.0
    %1578 = vmatpush1.msra.mxu0 0.0
    %1579 = vmatprep.subr.mxu0 0.0
    %1580 = vmatpush1.msra.mxu0 0.0
    %1581 = vmatprep.subr.mxu0 0.0
    %1582 = vmatpush1.msra.mxu0 0.0
    %1583 = vmatprep.subr.mxu0 0.0
    %1584 = vmatpush1.msra.mxu0 0.0
    %1585 = vmatprep.subr.mxu0 0.0
    %1586 = vmatpush1.msra.mxu0 0.0
    %1587 = vmatprep.subr.mxu0 0.0
    %1588 = vmatpush1.msra.mxu0 0.0
    %1589 = vmatprep.subr.mxu0 0.0
    %1590 = vmatpush1.msra.mxu0 0.0
    %1591 = vmatprep.subr.mxu0 0.0
    %1592 = vmatpush1.msra.mxu0 0.0
    %1593 = vmatprep.subr.mxu0 0.0
    %1594 = vmatpush1.msra.mxu0 0.0
    %1595 = vmatprep.subr.mxu0 0.0
    %1596 = vmatpush1.msra.mxu0 0.0
    %1597 = vmatprep.subr.mxu0 0.0
    %1598 = vmatpush1.msra.mxu0 0.0
    %1599 = vmatprep.subr.mxu0 0.0
    %1600 = vmatpush1.msra.mxu0 0.0
    %1601 = vmatprep.subr.mxu0 0.0
    %1602 = vmatpush1.msra.mxu0 0.0
    %1603 = vmatprep.subr.mxu0 0.0
    %1604 = vmatpush1.msra.mxu0 0.0
    %1605 = vmatprep.subr.mxu0 0.0
    %1606 = vmatpush1.msra.mxu0 0.0
    %1607 = vmatprep.subr.mxu0 0.0
    %1608 = vmatpush1.msra.mxu0 0.0
    %1609 = vmatprep.subr.mxu0 0.0
    %1610 = vmatpush1.msra.mxu0 0.0
    %1611 = vmatprep.mubr.f32.mxu0 0.0
    %1612 = vmatmul.mubr.f32.gmra.mrb[0].mxu0 %v243
    %v1613 = vpop.f32.mrb[0].mxu0
    %v1614 = vadd.f32 0.0, %v1613
    %v1615 = vpop.f32.mrb[0].mxu0
    %1616 = vmatprep.mubr.f32.mxu0 0.0
    %1617 = vmatmul.mubr.f32.gmra.mrb[0].mxu0 %v246
    %v1618 = vpop.f32.mrb[0].mxu0
    %v1619 = vadd.f32 0.0, %v1618
    %v1620 = vpop.f32.mrb[0].mxu0
    %1621 = vdwg.mxu0
    %1622 = vmatprep.subr.mxu0 0.0
    %1623 = vmatpush1.msra.mxu0 %v1545
    %1624 = vmatprep.subr.mxu0 0.0
    %1625 = vmatpush1.msra.mxu0 %v1546
    %1626 = vmatprep.subr.mxu0 0.0
    %1627 = vmatpush1.msra.mxu0 0.0
    %1628 = vmatprep.subr.mxu0 0.0
    %1629 = vmatpush1.msra.mxu0 0.0
    %1630 = vmatprep.subr.mxu0 0.0
    %1631 = vmatpush1.msra.mxu0 0.0
    %1632 = vmatprep.subr.mxu0 0.0
    %1633 = vmatpush1.msra.mxu0 0.0
    %1634 = vmatprep.subr.mxu0 0.0
    %1635 = vmatpush1.msra.mxu0 0.0
    %1636 = vmatprep.subr.mxu0 0.0
    %1637 = vmatpush1.msra.mxu0 0.0
    %1638 = vmatprep.subr.mxu0 0.0
    %1639 = vmatpush1.msra.mxu0 0.0
    %1640 = vmatprep.subr.mxu0 0.0
    %1641 = vmatpush1.msra.mxu0 0.0
    %1642 = vmatprep.subr.mxu0 0.0
    %1643 = vmatpush1.msra.mxu0 0.0
    %1644 = vmatprep.subr.mxu0 0.0
    %1645 = vmatpush1.msra.mxu0 0.0
    %1646 = vmatprep.subr.mxu0 0.0
    %1647 = vmatpush1.msra.mxu0 0.0
    %1648 = vmatprep.subr.mxu0 0.0
    %1649 = vmatpush1.msra.mxu0 0.0
    %1650 = vmatprep.subr.mxu0 0.0
    %1651 = vmatpush1.msra.mxu0 0.0
    %1652 = vmatprep.subr.mxu0 0.0
    %1653 = vmatpush1.msra.mxu0 0.0
    %1654 = vmatprep.subr.mxu0 0.0
    %1655 = vmatpush1.msra.mxu0 0.0
    %1656 = vmatprep.subr.mxu0 0.0
    %1657 = vmatpush1.msra.mxu0 0.0
    %1658 = vmatprep.subr.mxu0 0.0
    %1659 = vmatpush1.msra.mxu0 0.0
    %1660 = vmatprep.subr.mxu0 0.0
    %1661 = vmatpush1.msra.mxu0 0.0
    %1662 = vmatprep.subr.mxu0 0.0
    %1663 = vmatpush1.msra.mxu0 0.0
    %1664 = vmatprep.subr.mxu0 0.0
    %1665 = vmatpush1.msra.mxu0 0.0
    %1666 = vmatprep.subr.mxu0 0.0
    %1667 = vmatpush1.msra.mxu0 0.0
    %1668 = vmatprep.subr.mxu0 0.0
    %1669 = vmatpush1.msra.mxu0 0.0
    %1670 = vmatprep.subr.mxu0 0.0
    %1671 = vmatpush1.msra.mxu0 0.0
    %1672 = vmatprep.subr.mxu0 0.0
    %1673 = vmatpush1.msra.mxu0 0.0
    %1674 = vmatprep.subr.mxu0 0.0
    %1675 = vmatpush1.msra.mxu0 0.0
    %1676 = vmatprep.subr.mxu0 0.0
    %1677 = vmatpush1.msra.mxu0 0.0
    %1678 = vmatprep.subr.mxu0 0.0
    %1679 = vmatpush1.msra.mxu0 0.0
    %1680 = vmatprep.subr.mxu0 0.0
    %1681 = vmatpush1.msra.mxu0 0.0
    %1682 = vmatprep.subr.mxu0 0.0
    %1683 = vmatpush1.msra.mxu0 0.0
    %1684 = vmatprep.subr.mxu0 0.0
    %1685 = vmatpush1.msra.mxu0 0.0
    %1686 = vmatprep.mubr.f32.mxu0 0.0
    %1687 = vmatmul.mubr.f32.gmra.mrb[0].mxu0 %v324
    %v1688 = vpop.f32.mrb[0].mxu0
    %v1689 = vadd.f32 %v1614, %v1688
    %v1690 = vpop.f32.mrb[0].mxu0
    %1691 = vmatprep.mubr.f32.mxu0 0.0
    %1692 = vmatmul.mubr.f32.gmra.mrb[0].mxu0 %v327
    %v1693 = vpop.f32.mrb[0].mxu0
    %v1694 = vadd.f32 %v1619, %v1693
    %v1695 = vpop.f32.mrb[0].mxu0
    %1696 = vdwg.mxu0
    %1697 = vmatprep.subr.mxu0 0.0
    %1698 = vmatpush1.msra.mxu0 %v1504
    %1699 = vmatprep.subr.mxu0 0.0
    %1700 = vmatpush1.msra.mxu0 %v1509
    %1701 = vmatprep.subr.mxu0 0.0
    %1702 = vmatpush1.msra.mxu0 0.0
    %1703 = vmatprep.subr.mxu0 0.0
    %1704 = vmatpush1.msra.mxu0 0.0
    %1705 = vmatprep.subr.mxu0 0.0
    %1706 = vmatpush1.msra.mxu0 0.0
    %1707 = vmatprep.subr.mxu0 0.0
    %1708 = vmatpush1.msra.mxu0 0.0
    %1709 = vmatprep.subr.mxu0 0.0
    %1710 = vmatpush1.msra.mxu0 0.0
    %1711 = vmatprep.subr.mxu0 0.0
    %1712 = vmatpush1.msra.mxu0 0.0
    %1713 = vmatprep.subr.mxu0 0.0
    %1714 = vmatpush1.msra.mxu0 0.0
    %1715 = vmatprep.subr.mxu0 0.0
    %1716 = vmatpush1.msra.mxu0 0.0
    %1717 = vmatprep.subr.mxu0 0.0
    %1718 = vmatpush1.msra.mxu0 0.0
    %1719 = vmatprep.subr.mxu0 0.0
    %1720 = vmatpush1.msra.mxu0 0.0
    %1721 = vmatprep.subr.mxu0 0.0
    %1722 = vmatpush1.msra.mxu0 0.0
    %1723 = vmatprep.subr.mxu0 0.0
    %1724 = vmatpush1.msra.mxu0 0.0
    %1725 = vmatprep.subr.mxu0 0.0
    %1726 = vmatpush1.msra.mxu0 0.0
    %1727 = vmatprep.subr.mxu0 0.0
    %1728 = vmatpush1.msra.mxu0 0.0
    %1729 = vmatprep.subr.mxu0 0.0
    %1730 = vmatpush1.msra.mxu0 0.0
    %1731 = vmatprep.subr.mxu0 0.0
    %1732 = vmatpush1.msra.mxu0 0.0
    %1733 = vmatprep.subr.mxu0 0.0
    %1734 = vmatpush1.msra.mxu0 0.0
    %1735 = vmatprep.subr.mxu0 0.0
    %1736 = vmatpush1.msra.mxu0 0.0
    %1737 = vmatprep.subr.mxu0 0.0
    %1738 = vmatpush1.msra.mxu0 0.0
    %1739 = vmatprep.subr.mxu0 0.0
    %1740 = vmatpush1.msra.mxu0 0.0
    %1741 = vmatprep.subr.mxu0 0.0
    %1742 = vmatpush1.msra.mxu0 0.0
    %1743 = vmatprep.subr.mxu0 0.0
    %1744 = vmatpush1.msra.mxu0 0.0
    %1745 = vmatprep.subr.mxu0 0.0
    %1746 = vmatpush1.msra.mxu0 0.0
    %1747 = vmatprep.subr.mxu0 0.0
    %1748 = vmatpush1.msra.mxu0 0.0
    %1749 = vmatprep.subr.mxu0 0.0
    %1750 = vmatpush1.msra.mxu0 0.0
    %1751 = vmatprep.subr.mxu0 0.0
    %1752 = vmatpush1.msra.mxu0 0.0
    %1753 = vmatprep.subr.mxu0 0.0
    %1754 = vmatpush1.msra.mxu0 0.0
    %1755 = vmatprep.subr.mxu0 0.0
    %1756 = vmatpush1.msra.mxu0 0.0
    %1757 = vmatprep.subr.mxu0 0.0
    %1758 = vmatpush1.msra.mxu0 0.0
    %1759 = vmatprep.subr.mxu0 0.0
    %1760 = vmatpush1.msra.mxu0 0.0
    %1761 = vmatprep.mubr.f32.mxu0 0.0
    %1762 = vmatmul.mubr.f32.gmra.mrb[0].mxu0 %v405
    %v1763 = vpop.f32.mrb[0].mxu0
    %v1764 = vadd.f32 0.0, %v1763
    %v1765 = vpop.f32.mrb[0].mxu0
    %1766 = vmatprep.mubr.f32.mxu0 0.0
    %1767 = vmatmul.mubr.f32.gmra.mrb[0].mxu0 %v408
    %v1768 = vpop.f32.mrb[0].mxu0
    %v1769 = vadd.f32 0.0, %v1768
    %v1770 = vpop.f32.mrb[0].mxu0
    %1771 = vdwg.mxu0
    %v1772 = vadd.f32 %v1689, %v1764
    %v1773 = vadd.f32 %v1694, %v1769
    %v1774 = vadd.f32 %v1772, %v490
    %v1775 = vadd.f32 %v1773, %v495
    %s1776 = scalar_lea.vmem [#allocation2], 48
    %1777 = vst.msk [vmem:[%s1776] sm:$0xff] %vm241, %v1774
    %1778 = vst.msk [vmem:[%s1776 + $0x8] sm:$0xff] %vm241, %v1775
    // Predicated region
    $region26: #{downsample_forward.1} parent=1 // pred_check
      _
    $region27: #{downsample_forward.1} parent=1 // pred_check_branch
      %1780 = sbr.rel (0) target = $region29
    $region28: #{downsample_forward.1} parent=1 // pred_region
      %s1782 = ssub.s32 1024, 1024
      %1783 = vsyncadd [#allocation3], %s1782
      %s1784 = sshll.u32 [#allocation2], 4
      %s1785 = int_to_ptr.vmem [resolvable:$true] %s1784
      %1790 = dma.vmem_to_hbm [thread:$0]  %s1785, 1024, %s6, [#allocation3], 128, 128, 8
    $region29: #{downsample_forward.1} parent=1 // pred_fallthru
      _
    // Predicated region
    $region30: #{downsample_forward.1} parent=1 // pred_check
      _
    $region31: #{downsample_forward.1} parent=1 // pred_check_branch
      %1792 = sbr.rel (0) target = $region33
    $region32: #{downsample_forward.1} parent=1 // pred_region
      %1793 = dma.done [#allocation3], 1024
    $region33: #{downsample_forward.1} parent=1 // pred_fallthru
      _
    %1794 = vsyncpa [#allocation3], 1

</llo_original>
